<compile_context>
chip_gen: v7x
topology: tpu7x:2x2x1
jax: 0.10.0
libtpu: 0.0.40
codegen_flags: <defaults>
</compile_context>

<pallas_src>
import jax
import jax.numpy as jnp
from jax.experimental import pallas as pl
from jax.experimental.pallas import tpu as pltpu


def _round_up(n, m):
    return ((n + m - 1) // m) * m


def _pick_row_tile(n):
    # Largest row tile that still leaves a few grid steps (megacore sharding +
    # pipelined prefetch); big graphs get 512-row tiles, the demo gets 128.
    for tm in (512, 256, 128):
        if _round_up(n, tm) // tm >= 4:
            return tm
    return 128


def _pick_k_tile(n_pad):
    for tk in (512, 256, 128):
        if n_pad % tk == 0:
            return tk
    return 128


def _vmem_limit_bytes():
    # Generation-aware scoped-VMEM limit: ~3/4 of physical, capped at 96 MiB
    # (v5e/v6e: 128 MiB physical -> 96 MiB; v7x: 64 MiB per TC -> 48 MiB).
    try:
        info = pltpu.get_tpu_info()
        cap = getattr(info, "vmem_capacity_bytes", None)
        if cap:
            return int(min(cap * 3 // 4, 96 * 1024 * 1024))
    except Exception:
        pass
    return 32 * 1024 * 1024


# ---------------------------------------------------------------------------
# Kernels
# ---------------------------------------------------------------------------

def gcn_layer1_kernel(a_ref, xw1_ref, b1_ref, w2_ref, hw2_ref, acc_ref):
    """hw2_tile = relu(A_tile @ XW1 + b1) @ W2   (dropout eval -> identity)."""
    @pl.when(pl.program_id(1) == 0)
    def _():
        acc_ref[...] = jnp.zeros_like(acc_ref)

    acc_ref[...] += jnp.dot(a_ref[...], xw1_ref[...],
                            preferred_element_type=jnp.float32)

    @pl.when(pl.program_id(1) == pl.num_programs(1) - 1)
    def _():
        h = jnp.maximum(acc_ref[...] + b1_ref[...], 0.0)
        hw2 = jnp.dot(h.astype(jnp.bfloat16), w2_ref[...],
                      preferred_element_type=jnp.float32)
        hw2_ref[...] = hw2.astype(hw2_ref.dtype)


def gcn_layer2_kernel(a_ref, hw2_ref, b2_ref, o_ref, acc_ref):
    """out_tile = A_tile @ HW2 + b2."""
    @pl.when(pl.program_id(1) == 0)
    def _():
        acc_ref[...] = jnp.zeros_like(acc_ref)

    acc_ref[...] += jnp.dot(a_ref[...], hw2_ref[...],
                            preferred_element_type=jnp.float32)

    @pl.when(pl.program_id(1) == pl.num_programs(1) - 1)
    def _():
        o_ref[...] = acc_ref[...] + b2_ref[...]


# ---------------------------------------------------------------------------
# Wrapper
# ---------------------------------------------------------------------------

def build_normalized_adjacency_padded(edge_index, num_nodes, padded_nodes,
                                      dtype=jnp.bfloat16):
    """Dense padded A_hat = D^{-1/2}(A+I)D^{-1/2}, matching PyG gcn_norm.

    Scatter-adds directly into the zero-padded (padded_nodes, padded_nodes)
    buffer and casts once, so only one O(N^2) f32 buffer plus one cast copy
    touch HBM.  Padded rows/cols stay exactly zero.

    edge_index: int32 [2, E], row 0 = source, row 1 = target.
    Message passing: out[dst] += norm * x[src]  =>  A_hat[dst, src] = norm.
    """
    src, dst = edge_index[0], edge_index[1]
    loops = jnp.arange(num_nodes, dtype=edge_index.dtype)
    src = jnp.concatenate([src, loops])
    dst = jnp.concatenate([dst, loops])
    ew = jnp.ones(src.shape[0], dtype=jnp.float32)
    deg = jnp.zeros((num_nodes,), jnp.float32).at[dst].add(ew)
    dinv = jnp.where(deg > 0, 1.0 / jnp.sqrt(deg), 0.0)
    norm = dinv[src] * dinv[dst] * ew
    a = jnp.zeros((padded_nodes, padded_nodes), jnp.float32).at[dst, src].add(norm)
    return a.astype(dtype)


def gcn2_forward(x, edge_index, w1, b1, w2, b2, *, tm=None, tk=None):
    n, _ = x.shape
    hid = w1.shape[1]
    c = w2.shape[1]
    lane = 128

    if tm is None:
        tm = _pick_row_tile(n)
    n_pad = _round_up(n, tm)
    if tk is None:
        tk = _pick_k_tile(n_pad)
    h_pad = _round_up(hid, lane)
    c_pad = _round_up(c, lane)

    # A_hat built straight into the padded buffer, single bf16 cast.
    a_bf = build_normalized_adjacency_padded(edge_index, n, n_pad)

    # Hoisted feature transform (f32, tiny; K=F stays unpadded here).
    xw1 = x.astype(jnp.float32) @ w1.astype(jnp.float32)           # (n, hid)
    xw1_bf = jnp.zeros((n_pad, h_pad), jnp.bfloat16).at[:n, :hid].set(
        xw1.astype(jnp.bfloat16))
    b1_p = jnp.zeros((1, h_pad), jnp.float32).at[:, :hid].set(b1)
    w2_bf = jnp.zeros((h_pad, c_pad), jnp.bfloat16).at[:hid, :c].set(
        w2.astype(jnp.bfloat16))
    b2_p = jnp.zeros((1, c_pad), jnp.float32).at[:, :c].set(b2)

    grid = (n_pad // tm, n_pad // tk)
    sem = ("parallel", "arbitrary")
    vmem_limit = _vmem_limit_bytes()

    # Layer 1 (+ fused layer-2 feature transform):
    #   HW2 = relu(A_hat @ XW1 + b1) @ W2
    hw2_bf = pl.pallas_call(
        gcn_layer1_kernel,
        out_shape=jax.ShapeDtypeStruct((n_pad, c_pad), jnp.bfloat16),
        grid_spec=pltpu.PrefetchScalarGridSpec(
            num_scalar_prefetch=0,
            grid=grid,
            in_specs=[
                pl.BlockSpec((tm, tk), lambda i, k: (i, k)),        # A rows (streamed)
                pl.BlockSpec((tk, h_pad), lambda i, k: (k, 0)),     # XW1 slab (streamed)
                pl.BlockSpec((1, h_pad), lambda i, k: (0, 0)),      # b1 (resident)
                pl.BlockSpec((h_pad, c_pad), lambda i, k: (0, 0)),  # W2 (resident)
            ],
            out_specs=pl.BlockSpec((tm, c_pad), lambda i, k: (i, 0)),
            scratch_shapes=[pltpu.VMEM((tm, h_pad), jnp.float32)],
        ),
        compiler_params=pltpu.CompilerParams(
            dimension_semantics=sem, vmem_limit_bytes=vmem_limit),
    )(a_bf, xw1_bf, b1_p, w2_bf)

    # Layer 2: out = A_hat @ HW2 + b2
    out_p = pl.pallas_call(
        gcn_layer2_kernel,
        out_shape=jax.ShapeDtypeStruct((n_pad, c_pad), jnp.float32),
        grid_spec=pltpu.PrefetchScalarGridSpec(
            num_scalar_prefetch=0,
            grid=grid,
            in_specs=[
                pl.BlockSpec((tm, tk), lambda i, k: (i, k)),        # A rows (streamed)
                pl.BlockSpec((tk, c_pad), lambda i, k: (k, 0)),     # HW2 slab (streamed)
                pl.BlockSpec((1, c_pad), lambda i, k: (0, 0)),      # b2 (resident)
            ],
            out_specs=pl.BlockSpec((tm, c_pad), lambda i, k: (i, 0)),
            scratch_shapes=[pltpu.VMEM((tm, c_pad), jnp.float32)],
        ),
        compiler_params=pltpu.CompilerParams(
            dimension_semantics=sem, vmem_limit_bytes=vmem_limit),
    )(a_bf, hw2_bf, b2_p)

    return out_p[:n, :c]


# ---------------------------------------------------------------------------
# Demo / self-check
# ---------------------------------------------------------------------------

if __name__ == "__main__":
    # small, deterministic problem (padded internally to N_pad=256 -> grid=(2,1))
    N = 200         # number of nodes
    F_IN = 8        # dataset.num_features
    HID = 32        # hidden_channels
    C = 4           # dataset.num_classes

    key = jax.random.PRNGKey(0)
    kx, kw1, kw2 = jax.random.split(key, 3)

    x = jax.random.normal(kx, (N, F_IN), dtype=jnp.float32)

    # deterministic ring graph (both directions)
    idx = jnp.arange(N, dtype=jnp.int32)
    src = jnp.concatenate([idx, (idx + 1) % N])
    dst = jnp.concatenate([(idx + 1) % N, idx])
    edge_index = jnp.stack([src, dst])

    # deterministic "glorot-ish" parameter init (synthetic, no checkpoint);
    # nonzero biases exercise the padded-row annihilation path.
    w1 = jax.random.normal(kw1, (F_IN, HID), jnp.float32) * (1.0 / jnp.sqrt(F_IN))
    b1 = jnp.full((1, HID), 0.05, dtype=jnp.float32)
    w2 = jax.random.normal(kw2, (HID, C), jnp.float32) * (1.0 / jnp.sqrt(HID))
    b2 = jnp.full((1, C), -0.02, dtype=jnp.float32)

    fwd = jax.jit(gcn2_forward, static_argnames=("tm", "tk"))
    out = fwd(x, edge_index, w1, b1, w2, b2)
    jax.block_until_ready(out)

    # pure-JAX f32 reference (tolerance loosened for the bf16 data path)
    a_hat = build_normalized_adjacency_padded(edge_index, N, N, dtype=jnp.float32)
    ref_h = jnp.maximum(a_hat @ (x @ w1) + b1, 0.0)
    ref = a_hat @ (ref_h @ w2) + b2
    assert out.shape == (N, C)
    max_err = float(jnp.max(jnp.abs(out - ref)))
    assert jnp.allclose(out, ref, atol=5e-2, rtol=5e-2), f"max_err={max_err}"

    print("KERNEL_OK")
</pallas_src>

<mosaic_0001>
module attributes {stable_mosaic.version = 11 : i64} {
  func.func @gcn_layer1_kernel(%arg0: i32, %arg1: i32, %arg2: memref<128x256xbf16, #tpu.memory_space<vmem>>, %arg3: memref<256x128xbf16, #tpu.memory_space<vmem>>, %arg4: memref<1x128xf32, #tpu.memory_space<vmem>>, %arg5: memref<128x128xbf16, #tpu.memory_space<vmem>>, %arg6: memref<128x128xbf16, #tpu.memory_space<vmem>>, %arg7: memref<128x128xf32, #tpu.memory_space<vmem>>) attributes {dimension_semantics = [#tpu.dimension_semantics<parallel>, #tpu.dimension_semantics<arbitrary>], iteration_bounds = array<i64: 2, 1>, scalar_prefetch = 0 : i64, scratch_operands = 1 : i64, tpu.core_type = #tpu.core_type<tc>, window_params = [{transform_indices = @transform_0, window_bounds = array<i64: 128, 256>}, {transform_indices = @transform_1, window_bounds = array<i64: 256, 128>}, {pipeline_mode = #tpu.pipeline_mode<synchronous>, transform_indices = @transform_2, window_bounds = array<i64: 1, 128>}, {pipeline_mode = #tpu.pipeline_mode<synchronous>, transform_indices = @transform_3, window_bounds = array<i64: 128, 128>}, {transform_indices = @transform_4, window_bounds = array<i64: 128, 128>}]} {
    %c0_i32 = arith.constant 0 : i32
    %0 = arith.cmpi eq, %arg1, %c0_i32 : i32
    %1 = arith.extui %0 : i1 to i32
    %c0_i32_0 = arith.constant 0 : i32
    %2 = arith.cmpi ne, %1, %c0_i32_0 : i32
    scf.if %2 {
      %cst_10 = arith.constant 0.000000e+00 : f32
      %12 = vector.broadcast %cst_10 : f32 to vector<128x128xf32>
      %c0_11 = arith.constant 0 : index
      %c0_12 = arith.constant 0 : index
      %13 = vector.load %arg7[%c0_11, %c0_12] : memref<128x128xf32, #tpu.memory_space<vmem>>, vector<128x128xf32>
      tpu.vector_store %arg7[%c0_11, %c0_12], %12 {strides = array<i32>} : memref<128x128xf32, #tpu.memory_space<vmem>>, vector<128x128xf32>,
    } else {
    }
    %c0 = arith.constant 0 : index
    %c0_1 = arith.constant 0 : index
    %3 = vector.load %arg7[%c0, %c0_1] : memref<128x128xf32, #tpu.memory_space<vmem>>, vector<128x128xf32>
    %c0_2 = arith.constant 0 : index
    %c0_3 = arith.constant 0 : index
    %4 = vector.load %arg2[%c0_2, %c0_3] : memref<128x256xbf16, #tpu.memory_space<vmem>>, vector<128x256xbf16>
    %c0_4 = arith.constant 0 : index
    %c0_5 = arith.constant 0 : index
    %5 = vector.load %arg3[%c0_4, %c0_5] : memref<256x128xbf16, #tpu.memory_space<vmem>>, vector<256x128xbf16>
    %cst = arith.constant dense<0.000000e+00> : vector<128x128xf32>
    %6 = tpu.matmul %4, %5, %cst {dimension_numbers = #tpu.dot_dimension_numbers<[1], [0], [0], [1], [0, 0, 1, 1], [], []>} : vector<128x256xbf16>, vector<256x128xbf16>, vector<128x128xf32> -> vector<128x128xf32>
    %7 = arith.addf %3, %6 : vector<128x128xf32>
    %c0_6 = arith.constant 0 : index
    %c0_7 = arith.constant 0 : index
    %8 = vector.load %arg7[%c0_6, %c0_7] : memref<128x128xf32, #tpu.memory_space<vmem>>, vector<128x128xf32>
    tpu.vector_store %arg7[%c0_6, %c0_7], %7 {strides = array<i32>} : memref<128x128xf32, #tpu.memory_space<vmem>>, vector<128x128xf32>,
    %c0_i32_8 = arith.constant 0 : i32
    %9 = arith.cmpi eq, %arg1, %c0_i32_8 : i32
    %10 = arith.extui %9 : i1 to i32
    %c0_i32_9 = arith.constant 0 : i32
    %11 = arith.cmpi ne, %10, %c0_i32_9 : i32
    scf.if %11 {
      %c0_10 = arith.constant 0 : index
      %c0_11 = arith.constant 0 : index
      %12 = vector.load %arg7[%c0_10, %c0_11] : memref<128x128xf32, #tpu.memory_space<vmem>>, vector<128x128xf32>
      %c0_12 = arith.constant 0 : index
      %c0_13 = arith.constant 0 : index
      %13 = vector.load %arg4[%c0_12, %c0_13] : memref<1x128xf32, #tpu.memory_space<vmem>>, vector<1x128xf32>
      %14 = vector.broadcast %13 : vector<1x128xf32> to vector<128x128xf32>
      %15 = arith.addf %12, %14 : vector<128x128xf32>
      %cst_14 = arith.constant 0.000000e+00 : f32
      %16 = vector.broadcast %cst_14 : f32 to vector<128x128xf32>
      %17 = arith.maximumf %15, %16 : vector<128x128xf32>
      %18 = arith.truncf %17 : vector<128x128xf32> to vector<128x128xbf16>
      %c0_15 = arith.constant 0 : index
      %c0_16 = arith.constant 0 : index
      %19 = vector.load %arg5[%c0_15, %c0_16] : memref<128x128xbf16, #tpu.memory_space<vmem>>, vector<128x128xbf16>
      %cst_17 = arith.constant dense<0.000000e+00> : vector<128x128xf32>
      %20 = tpu.matmul %18, %19, %cst_17 {dimension_numbers = #tpu.dot_dimension_numbers<[1], [0], [0], [1], [0, 0, 1, 1], [], []>} : vector<128x128xbf16>, vector<128x128xbf16>, vector<128x128xf32> -> vector<128x128xf32>
      %21 = arith.truncf %20 : vector<128x128xf32> to vector<128x128xbf16>
      %c0_18 = arith.constant 0 : index
      %c0_19 = arith.constant 0 : index
      %22 = vector.load %arg6[%c0_18, %c0_19] : memref<128x128xbf16, #tpu.memory_space<vmem>>, vector<128x128xbf16>
      tpu.vector_store %arg6[%c0_18, %c0_19], %21 {strides = array<i32>} : memref<128x128xbf16, #tpu.memory_space<vmem>>, vector<128x128xbf16>,
    } else {
    }
    return
  }
  func.func @transform_0(%arg0: i32, %arg1: i32) -> (i32, i32) {
    %c0_i32 = arith.constant 0 : i32
    return %arg0, %arg1 : i32, i32
  }
  func.func @transform_1(%arg0: i32, %arg1: i32) -> (i32, i32) {
    %c0_i32 = arith.constant 0 : i32
    %c0_i32_0 = arith.constant 0 : i32
    return %arg1, %c0_i32 : i32, i32
  }
  func.func @transform_2(%arg0: i32, %arg1: i32) -> (i32, i32) {
    %c0_i32 = arith.constant 0 : i32
    %c0_i32_0 = arith.constant 0 : i32
    %c0_i32_1 = arith.constant 0 : i32
    return %c0_i32, %c0_i32_0 : i32, i32
  }
  func.func @transform_3(%arg0: i32, %arg1: i32) -> (i32, i32) {
    %c0_i32 = arith.constant 0 : i32
    %c0_i32_0 = arith.constant 0 : i32
    %c0_i32_1 = arith.constant 0 : i32
    return %c0_i32, %c0_i32_0 : i32, i32
  }
  func.func @transform_4(%arg0: i32, %arg1: i32) -> (i32, i32) {
    %c0_i32 = arith.constant 0 : i32
    %c0_i32_0 = arith.constant 0 : i32
    return %arg0, %c0_i32 : i32, i32
  }
}

module attributes {stable_mosaic.version = 11 : i64} {
  func.func @gcn_layer2_kernel(%arg0: i32, %arg1: i32, %arg2: memref<128x256xbf16, #tpu.memory_space<vmem>>, %arg3: memref<256x128xbf16, #tpu.memory_space<vmem>>, %arg4: memref<1x128xf32, #tpu.memory_space<vmem>>, %arg5: memref<128x128xf32, #tpu.memory_space<vmem>>, %arg6: memref<128x128xf32, #tpu.memory_space<vmem>>) attributes {dimension_semantics = [#tpu.dimension_semantics<parallel>, #tpu.dimension_semantics<arbitrary>], iteration_bounds = array<i64: 2, 1>, scalar_prefetch = 0 : i64, scratch_operands = 1 : i64, tpu.core_type = #tpu.core_type<tc>, window_params = [{transform_indices = @transform_0, window_bounds = array<i64: 128, 256>}, {transform_indices = @transform_1, window_bounds = array<i64: 256, 128>}, {pipeline_mode = #tpu.pipeline_mode<synchronous>, transform_indices = @transform_2, window_bounds = array<i64: 1, 128>}, {transform_indices = @transform_3, window_bounds = array<i64: 128, 128>}]} {
    %c0_i32 = arith.constant 0 : i32
    %0 = arith.cmpi eq, %arg1, %c0_i32 : i32
    %1 = arith.extui %0 : i1 to i32
    %c0_i32_0 = arith.constant 0 : i32
    %2 = arith.cmpi ne, %1, %c0_i32_0 : i32
    scf.if %2 {
      %cst_10 = arith.constant 0.000000e+00 : f32
      %12 = vector.broadcast %cst_10 : f32 to vector<128x128xf32>
      %c0_11 = arith.constant 0 : index
      %c0_12 = arith.constant 0 : index
      %13 = vector.load %arg6[%c0_11, %c0_12] : memref<128x128xf32, #tpu.memory_space<vmem>>, vector<128x128xf32>
      tpu.vector_store %arg6[%c0_11, %c0_12], %12 {strides = array<i32>} : memref<128x128xf32, #tpu.memory_space<vmem>>, vector<128x128xf32>,
    } else {
    }
    %c0 = arith.constant 0 : index
    %c0_1 = arith.constant 0 : index
    %3 = vector.load %arg6[%c0, %c0_1] : memref<128x128xf32, #tpu.memory_space<vmem>>, vector<128x128xf32>
    %c0_2 = arith.constant 0 : index
    %c0_3 = arith.constant 0 : index
    %4 = vector.load %arg2[%c0_2, %c0_3] : memref<128x256xbf16, #tpu.memory_space<vmem>>, vector<128x256xbf16>
    %c0_4 = arith.constant 0 : index
    %c0_5 = arith.constant 0 : index
    %5 = vector.load %arg3[%c0_4, %c0_5] : memref<256x128xbf16, #tpu.memory_space<vmem>>, vector<256x128xbf16>
    %cst = arith.constant dense<0.000000e+00> : vector<128x128xf32>
    %6 = tpu.matmul %4, %5, %cst {dimension_numbers = #tpu.dot_dimension_numbers<[1], [0], [0], [1], [0, 0, 1, 1], [], []>} : vector<128x256xbf16>, vector<256x128xbf16>, vector<128x128xf32> -> vector<128x128xf32>
    %7 = arith.addf %3, %6 : vector<128x128xf32>
    %c0_6 = arith.constant 0 : index
    %c0_7 = arith.constant 0 : index
    %8 = vector.load %arg6[%c0_6, %c0_7] : memref<128x128xf32, #tpu.memory_space<vmem>>, vector<128x128xf32>
    tpu.vector_store %arg6[%c0_6, %c0_7], %7 {strides = array<i32>} : memref<128x128xf32, #tpu.memory_space<vmem>>, vector<128x128xf32>,
    %c0_i32_8 = arith.constant 0 : i32
    %9 = arith.cmpi eq, %arg1, %c0_i32_8 : i32
    %10 = arith.extui %9 : i1 to i32
    %c0_i32_9 = arith.constant 0 : i32
    %11 = arith.cmpi ne, %10, %c0_i32_9 : i32
    scf.if %11 {
      %c0_10 = arith.constant 0 : index
      %c0_11 = arith.constant 0 : index
      %12 = vector.load %arg6[%c0_10, %c0_11] : memref<128x128xf32, #tpu.memory_space<vmem>>, vector<128x128xf32>
      %c0_12 = arith.constant 0 : index
      %c0_13 = arith.constant 0 : index
      %13 = vector.load %arg4[%c0_12, %c0_13] : memref<1x128xf32, #tpu.memory_space<vmem>>, vector<1x128xf32>
      %14 = vector.broadcast %13 : vector<1x128xf32> to vector<128x128xf32>
      %15 = arith.addf %12, %14 : vector<128x128xf32>
      %c0_14 = arith.constant 0 : index
      %c0_15 = arith.constant 0 : index
      %16 = vector.load %arg5[%c0_14, %c0_15] : memref<128x128xf32, #tpu.memory_space<vmem>>, vector<128x128xf32>
      tpu.vector_store %arg5[%c0_14, %c0_15], %15 {strides = array<i32>} : memref<128x128xf32, #tpu.memory_space<vmem>>, vector<128x128xf32>,
    } else {
    }
    return
  }
  func.func @transform_0(%arg0: i32, %arg1: i32) -> (i32, i32) {
    %c0_i32 = arith.constant 0 : i32
    return %arg0, %arg1 : i32, i32
  }
  func.func @transform_1(%arg0: i32, %arg1: i32) -> (i32, i32) {
    %c0_i32 = arith.constant 0 : i32
    %c0_i32_0 = arith.constant 0 : i32
    return %arg1, %c0_i32 : i32, i32
  }
  func.func @transform_2(%arg0: i32, %arg1: i32) -> (i32, i32) {
    %c0_i32 = arith.constant 0 : i32
    %c0_i32_0 = arith.constant 0 : i32
    %c0_i32_1 = arith.constant 0 : i32
    return %c0_i32, %c0_i32_0 : i32, i32
  }
  func.func @transform_3(%arg0: i32, %arg1: i32) -> (i32, i32) {
    %c0_i32 = arith.constant 0 : i32
    %c0_i32_0 = arith.constant 0 : i32
    return %arg0, %c0_i32 : i32, i32
  }
}

</mosaic_0001>

<llo_original>
// kernel: mul.1
$region0: #{mul.1}
  #allocation0 [shape = 's32[1]{0}', space=sflag, size = 0x4, scoped, tag = 'scoped memory for mul.1']
  %s0 = inlined_call_operand.vmem [shape: f32[600], index: 0, kind: input, shape index: {}]
  %s1 = inlined_call_operand.vmem [shape: f32[600], index: 1, kind: input, shape index: {}]
  %s2 = inlined_call_operand.vmem [shape: f32[600], index: 2, kind: output, shape index: {}]
  %v3 = vld [vmem:[%s0] sm:$0x1f]
  %v4 = vld [vmem:[%s1] sm:$0x1f]
  %5 = xla_tuple %v3, %v4
  %6 = xla_tuple %5
  %v7 = vmul.f32 %v3, %v4
  %8 = xla_tuple %v7
  %9 = vst [vmem:[%s2] sm:$0xff] %v7

// kernel: gcn2_forward.3
$region0: #{gcn2_forward.3}
  #allocation0 [shape = 'u32[]', space=smem, size = 0x4, offset = 0x4, fixed_abs, tag = 'smem constant byte address 0x4 - core index']
  #allocation1 [shape = 'u32[144,128]{1,0:T(1,128)}', space=vmem, size = 0x12000, scoped, tag = 'internal scratch']
  #allocation2 [shape = 'f32[128,128]{1,0:T(8,128)}', space=vmem, size = 0x10000, scoped, tag = 'scratch operand']
  %s0 = inlined_call_operand.vmem [shape: bf16[256,256], index: 0, kind: input, shape index: {}]
  %s1 = inlined_call_operand.vmem [shape: bf16[256,128], index: 1, kind: input, shape index: {}]
  %s2 = inlined_call_operand.vmem [shape: f32[1,128], index: 2, kind: input, shape index: {}]
  %s3 = inlined_call_operand.vmem [shape: f32[256,128], index: 3, kind: output, shape index: {}]
  %s4 = sld [smem:[#allocation0]]
  $region53: #{gcn2_forward.3} parent=0
    _
  %s6 = ssub.s32 1, %s4
  %s7 = scalar_select 0, %s6, %s4
  loop: start=0, step=1, limit=4
  $region2: #{gcn2_forward.3} parent=0 // loop_pre_header
    _
  $region3: #{gcn2_forward.3} parent=0 // loop_header
    %s9 = sphi 0, %s13
    %p10 = scmp.ge.s32.totalorder %s9, 4
    %s16 = sphi 0, %s28
    %s17 = sphi 0, %s24
    %s18 = sphi 0, %s16
    %s19 = sphi 0, %s17
    %s20 = sphi 0, %s18
    %s21 = sphi 0, %s19
    %s33 = sphi 0, %s35
    %s36 = sphi 0, %s33
    %s37 = sphi 0, %s36
    %s53 = sphi 0, %s37
    %s59 = sphi 0, %s61
    %s62 = sphi 0, %s59
    %s63 = sphi 0, %s62
    %s79 = sphi 0, %s63
    %s83 = sphi 0, %s83
    %s85 = sphi 0, %s83
    %s86 = sphi 0, %s85
    %s100 = sphi 0, %s86
    %s106 = sphi 0, %s108
    %s109 = sphi 0, %s106
    %s110 = sphi 0, %s109
    %s126 = sphi 0, %s110
  $region4: #{gcn2_forward.3} parent=0 // loop_header_branch
    %12 = sbr.rel (%p10) target = $region8
  $region5: #{gcn2_forward.3} parent=0 // loop_body
    %s14 = ssub.s32 %s9, 1
    %s15 = ssub.s32 %s9, 2
    %s22 = sadd.s32 1, %s17
    %p23 = scmp.ge.s32.totalorder %s22, 1
    %s24 = scalar_select %p23, 0, %s22
    %s25 = sadd.s32 1, %s16
    %s26 = scalar_select %p23, %s25, %s16
    %p27 = scmp.ge.s32.totalorder %s26, 2
    %s28 = scalar_select %p27, 0, %s26
    %s29 = ssub.s32 %s16, %s28
    %s30 = ssub.s32 %s17, %s24
    %s31 = sor.u32 %s29, %s30
    %p32 = scmp.eq.s32.totalorder %s31, 0
    %s34 = sadd.s32 %s33, 1
    %s35 = scalar_select %p32, %s33, %s34
    %p38 = pneg %p32
    %p39 = scmp.eq.s32.totalorder %s9, 1
    %p40 = por %p38, %p39
    %p41 = scmp.ne.s32.totalorder %s33, %s36
    %p42 = scmp.eq.s32.totalorder %s9, 0
    %p43 = por %p41, %p42
    %p44 = scmp.ne.s32.totalorder %s33, %s36
    %p45 = scmp.eq.s32.totalorder %s14, 1
    %p46 = por %p44, %p45
    %p47 = scmp.ne.s32.totalorder %s36, %s37
    %p48 = scmp.eq.s32.totalorder %s14, 0
    %p49 = por %p47, %p48
    %p50 = scmp.ne.s32.totalorder %s36, %s37
    %p51 = scmp.eq.s32.totalorder %s15, 1
    %p52 = por %p50, %p51
    %p54 = scmp.ne.s32.totalorder %s37, %s53
    %p55 = scmp.eq.s32.totalorder %s15, 0
    %p56 = por %p54, %p55
    %s57 = ssub.s32 %s17, %s24
    %p58 = scmp.eq.s32.totalorder %s57, 0
    %s60 = sadd.s32 %s59, 1
    %s61 = scalar_select %p58, %s59, %s60
    %p64 = pneg %p58
    %p65 = scmp.eq.s32.totalorder %s9, 1
    %p66 = por %p64, %p65
    %p67 = scmp.ne.s32.totalorder %s59, %s62
    %p68 = scmp.eq.s32.totalorder %s9, 0
    %p69 = por %p67, %p68
    %p70 = scmp.ne.s32.totalorder %s59, %s62
    %p71 = scmp.eq.s32.totalorder %s14, 1
    %p72 = por %p70, %p71
    %p73 = scmp.ne.s32.totalorder %s62, %s63
    %p74 = scmp.eq.s32.totalorder %s14, 0
    %p75 = por %p73, %p74
    %p76 = scmp.ne.s32.totalorder %s62, %s63
    %p77 = scmp.eq.s32.totalorder %s15, 1
    %p78 = por %p76, %p77
    %p80 = scmp.ne.s32.totalorder %s63, %s79
    %p81 = scmp.eq.s32.totalorder %s15, 0
    %p82 = por %p80, %p81
    %s84 = sadd.s32 %s83, 1
    %p87 = scmp.eq.s32.totalorder %s9, 1
    %p88 = scmp.ne.s32.totalorder %s83, %s85
    %p89 = scmp.eq.s32.totalorder %s9, 0
    %p90 = por %p88, %p89
    %p91 = scmp.ne.s32.totalorder %s83, %s85
    %p92 = scmp.eq.s32.totalorder %s14, 1
    %p93 = por %p91, %p92
    %p94 = scmp.ne.s32.totalorder %s85, %s86
    %p95 = scmp.eq.s32.totalorder %s14, 0
    %p96 = por %p94, %p95
    %p97 = scmp.ne.s32.totalorder %s85, %s86
    %p98 = scmp.eq.s32.totalorder %s15, 1
    %p99 = por %p97, %p98
    %p101 = scmp.ne.s32.totalorder %s86, %s100
    %p102 = scmp.eq.s32.totalorder %s15, 0
    %p103 = por %p101, %p102
    %s104 = ssub.s32 %s16, %s28
    %p105 = scmp.eq.s32.totalorder %s104, 0
    %s107 = sadd.s32 %s106, 1
    %s108 = scalar_select %p105, %s106, %s107
    %p111 = pneg %p105
    %p112 = scmp.eq.s32.totalorder %s9, 1
    %p113 = por %p111, %p112
    %p114 = scmp.ne.s32.totalorder %s106, %s109
    %p115 = scmp.eq.s32.totalorder %s9, 0
    %p116 = por %p114, %p115
    %p117 = scmp.ne.s32.totalorder %s106, %s109
    %p118 = scmp.eq.s32.totalorder %s14, 1
    %p119 = por %p117, %p118
    %p120 = scmp.ne.s32.totalorder %s109, %s110
    %p121 = scmp.eq.s32.totalorder %s14, 0
    %p122 = por %p120, %p121
    %p123 = scmp.ne.s32.totalorder %s109, %s110
    %p124 = scmp.eq.s32.totalorder %s15, 1
    %p125 = por %p123, %p124
    %p127 = scmp.ne.s32.totalorder %s110, %s126
    %p128 = scmp.eq.s32.totalorder %s15, 0
    %p129 = por %p127, %p128
    %p130 = scmp.le.s32.totalorder 1, %s9
    %p131 = scmp.lt.s32.totalorder %s9, 3
    %p132 = pnand %p130, %p131
    %p133 = pneg %p132
    // Predicated region
    $region9: #{gcn2_forward.3} parent=5 // pred_check
      _
    $region10: #{gcn2_forward.3} parent=5 // pred_check_branch
      %135 = sbr.rel (%p132) target = $region12
    $region11: #{gcn2_forward.3} parent=5 // pred_region
      %s136 = ssub.s32 %s9, 1
      // Predicated region
      $region13: #{gcn2_forward.3} parent=11 // pred_check
        %p137 = pneg %p75
      $region14: #{gcn2_forward.3} parent=11 // pred_check_branch
        %139 = sbr.rel (%p137) target = $region16
      $region15: #{gcn2_forward.3} parent=11 // pred_region
        %s140 = smul.u32 32, %s19
        %p141 = scmp.lt.s32.totalorder %s140, 31
        %s142 = scalar_select %p141, %s140, 31
        %s143 = smul.addr %s142, 4
        %s144 = scalar_lea.vmem %s1, %s143
        %s145 = smul.u32 32, %s19
      $region16: #{gcn2_forward.3} parent=11 // pred_fallthru
        _
      // Predicated region
      $region17: #{gcn2_forward.3} parent=11 // pred_check
        %p146 = pneg %p96
      $region18: #{gcn2_forward.3} parent=11 // pred_check_branch
        %148 = sbr.rel (%p146) target = $region20
      $region19: #{gcn2_forward.3} parent=11 // pred_region
        _
      $region20: #{gcn2_forward.3} parent=11 // pred_fallthru
        _
    $region12: #{gcn2_forward.3} parent=5 // pred_fallthru
      _
    %p149 = scmp.lt.s32.totalorder %s9, 2
    // Predicated region
    $region21: #{gcn2_forward.3} parent=5 // pred_check
      %p150 = pneg %p149
    $region22: #{gcn2_forward.3} parent=5 // pred_check_branch
      %152 = sbr.rel (%p150) target = $region24
    $region23: #{gcn2_forward.3} parent=5 // pred_region
      // Predicated region
      $region25: #{gcn2_forward.3} parent=23 // pred_check
        %p153 = pneg %p43
      $region26: #{gcn2_forward.3} parent=23 // pred_check_branch
        %155 = sbr.rel (%p153) target = $region28
      $region27: #{gcn2_forward.3} parent=23 // pred_region
        %s156 = smul.u32 16, %s16
        %s157 = smul.u32 2, %s17
        %p158 = scmp.lt.s32.totalorder %s156, 31
        %s159 = scalar_select %p158, %s156, 31
        %p160 = scmp.lt.s32.totalorder %s157, 1
        %s161 = scalar_select %p160, %s157, 1
        %s162 = smul.addr %s159, 2
        %s163 = sadd.s32 %s161, %s162
        %s164 = smul.addr %s163, 4
        %s165 = scalar_lea.vmem %s0, %s164
        %s166 = smul.u32 16, %s16
        %s167 = smul.u32 2, %s17
      $region28: #{gcn2_forward.3} parent=23 // pred_fallthru
        _
    $region24: #{gcn2_forward.3} parent=5 // pred_fallthru
      _
    %p168 = scmp.le.s32.totalorder 1, %s9
    %p169 = scmp.lt.s32.totalorder %s9, 3
    %p170 = pnand %p168, %p169
    %p171 = pneg %p170
    // Predicated region
    $region29: #{gcn2_forward.3} parent=5 // pred_check
      _
    $region30: #{gcn2_forward.3} parent=5 // pred_check_branch
      %173 = sbr.rel (%p170) target = $region32
    $region31: #{gcn2_forward.3} parent=5 // pred_region
      %s174 = ssub.s32 %s9, 1
      %s175 = smul.u32 16, %s18
      %s176 = smul.u32 2, %s19
      %p177 = scmp.lt.s32.totalorder %s175, 31
      %s178 = scalar_select %p177, %s175, 31
      %p179 = scmp.lt.s32.totalorder %s176, 1
      %s180 = scalar_select %p179, %s176, 1
      %s181 = smul.addr %s178, 2
      %s182 = sadd.s32 %s180, %s181
      %s183 = smul.addr %s182, 4
      %s184 = scalar_lea.vmem %s0, %s183
      %p185 = pneg %p49
      %p186 = pneg %p46
      %s187 = smul.u32 32, %s19
      %p188 = scmp.lt.s32.totalorder %s187, 31
      %s189 = scalar_select %p188, %s187, 31
      %s190 = smul.addr %s189, 4
      %s191 = scalar_lea.vmem %s1, %s190
      %p192 = pneg %p75
      %p193 = pneg %p72
      %p194 = pneg %p96
      %p195 = pneg %p93
      %p196 = pneg %p122
      %p197 = pneg %p119
      %s198 = smul.u32 16, %s18
      %p199 = scmp.lt.s32.totalorder %s198, 31
      %s200 = scalar_select %p199, %s198, 31
      %s201 = smul.addr %s200, 8
      %s202 = scalar_lea.vmem %s3, %s201
      %s203 = smul.u32 16, %s18
      %s204 = smul.u32 2, %s19
      %p205 = scmp.lt.s32.totalorder %s203, 31
      %s206 = scalar_select %p205, %s203, 31
      %p207 = scmp.lt.s32.totalorder %s204, 1
      %s208 = scalar_select %p207, %s204, 1
      %s209 = smul.addr %s206, 2
      %s210 = sadd.s32 %s208, %s209
      %s211 = smul.addr %s210, 4
      %s212 = scalar_lea.vmem %s0, %s211
      %s213 = smul.u32 16, %s18
      %s214 = smul.u32 2, %s19
      %s215 = smul.u32 32, %s19
      %p216 = scmp.lt.s32.totalorder %s215, 31
      %s217 = scalar_select %p216, %s215, 31
      %s218 = smul.addr %s217, 4
      %s219 = scalar_lea.vmem %s1, %s218
      %s220 = smul.u32 32, %s19
      %s221 = smul.u32 16, %s18
      %p222 = scmp.lt.s32.totalorder %s221, 31
      %s223 = scalar_select %p222, %s221, 31
      %s224 = smul.addr %s223, 8
      %s225 = scalar_lea.vmem %s3, %s224
      %s226 = smul.u32 16, %s18
      %p228 = scmp.eq.s32.totalorder %s19, 0
      // Predicated region
      $region33: #{gcn2_forward.3} parent=31 // pred_check
        %p229 = pneg %p228
      $region34: #{gcn2_forward.3} parent=31 // pred_check_branch
        %231 = sbr.rel (%p229) target = $region36
      $region35: #{gcn2_forward.3} parent=31 // pred_region
        %232 = vst [vmem:[#allocation2] sm:$0xff] 0.0
        %233 = vst [vmem:[#allocation2 + $0x8] sm:$0xff] 0.0
        %234 = vst [vmem:[#allocation2 + $0x10] sm:$0xff] 0.0
        %235 = vst [vmem:[#allocation2 + $0x18] sm:$0xff] 0.0
        %236 = vst [vmem:[#allocation2 + $0x20] sm:$0xff] 0.0
        %237 = vst [vmem:[#allocation2 + $0x28] sm:$0xff] 0.0
        %238 = vst [vmem:[#allocation2 + $0x30] sm:$0xff] 0.0
        %239 = vst [vmem:[#allocation2 + $0x38] sm:$0xff] 0.0
        %240 = vst [vmem:[#allocation2 + $0x40] sm:$0xff] 0.0
        %241 = vst [vmem:[#allocation2 + $0x48] sm:$0xff] 0.0
        %242 = vst [vmem:[#allocation2 + $0x50] sm:$0xff] 0.0
        %243 = vst [vmem:[#allocation2 + $0x58] sm:$0xff] 0.0
        %244 = vst [vmem:[#allocation2 + $0x60] sm:$0xff] 0.0
        %245 = vst [vmem:[#allocation2 + $0x68] sm:$0xff] 0.0
        %246 = vst [vmem:[#allocation2 + $0x70] sm:$0xff] 0.0
        %247 = vst [vmem:[#allocation2 + $0x78] sm:$0xff] 0.0
      $region36: #{gcn2_forward.3} parent=31 // pred_fallthru
        _
      %v248 = vld [vmem:[#allocation2] sm:$0xff]
      %v249 = vld [vmem:[#allocation2 + $0x8] sm:$0xff]
      %v250 = vld [vmem:[#allocation2 + $0x10] sm:$0xff]
      %v251 = vld [vmem:[#allocation2 + $0x18] sm:$0xff]
      %v252 = vld [vmem:[#allocation2 + $0x20] sm:$0xff]
      %v253 = vld [vmem:[#allocation2 + $0x28] sm:$0xff]
      %v254 = vld [vmem:[#allocation2 + $0x30] sm:$0xff]
      %v255 = vld [vmem:[#allocation2 + $0x38] sm:$0xff]
      %v256 = vld [vmem:[#allocation2 + $0x40] sm:$0xff]
      %v257 = vld [vmem:[#allocation2 + $0x48] sm:$0xff]
      %v258 = vld [vmem:[#allocation2 + $0x50] sm:$0xff]
      %v259 = vld [vmem:[#allocation2 + $0x58] sm:$0xff]
      %v260 = vld [vmem:[#allocation2 + $0x60] sm:$0xff]
      %v261 = vld [vmem:[#allocation2 + $0x68] sm:$0xff]
      %v262 = vld [vmem:[#allocation2 + $0x70] sm:$0xff]
      %v263 = vld [vmem:[#allocation2 + $0x78] sm:$0xff]
      %v264 = vld [vmem:[%s212] sm:$0xff]
      %v265 = vld [vmem:[%s212 + $0x8] sm:$0xff]
      %v266 = vld [vmem:[%s212 + $0x10] sm:$0xff]
      %v267 = vld [vmem:[%s212 + $0x18] sm:$0xff]
      %v268 = vld [vmem:[%s212 + $0x20] sm:$0xff]
      %v269 = vld [vmem:[%s212 + $0x28] sm:$0xff]
      %v270 = vld [vmem:[%s212 + $0x30] sm:$0xff]
      %v271 = vld [vmem:[%s212 + $0x38] sm:$0xff]
      %v272 = vld [vmem:[%s212 + $0x40] sm:$0xff]
      %v273 = vld [vmem:[%s212 + $0x48] sm:$0xff]
      %v274 = vld [vmem:[%s212 + $0x50] sm:$0xff]
      %v275 = vld [vmem:[%s212 + $0x58] sm:$0xff]
      %v276 = vld [vmem:[%s212 + $0x60] sm:$0xff]
      %v277 = vld [vmem:[%s212 + $0x68] sm:$0xff]
      %v278 = vld [vmem:[%s212 + $0x70] sm:$0xff]
      %v279 = vld [vmem:[%s212 + $0x78] sm:$0xff]
      %v280 = vld [vmem:[%s219] sm:$0xf]
      %v281 = vld [vmem:[%s219 + $0x4] sm:$0xf]
      %v282 = vld [vmem:[%s219 + $0x8] sm:$0xf]
      %v283 = vld [vmem:[%s219 + $0xc] sm:$0xf]
      %v284 = vld [vmem:[%s219 + $0x10] sm:$0xf]
      %v285 = vld [vmem:[%s219 + $0x14] sm:$0xf]
      %v286 = vld [vmem:[%s219 + $0x18] sm:$0xf]
      %v287 = vld [vmem:[%s219 + $0x1c] sm:$0xf]
      %v288 = vld [vmem:[%s219 + $0x20] sm:$0xf]
      %v289 = vld [vmem:[%s219 + $0x24] sm:$0xf]
      %v290 = vld [vmem:[%s219 + $0x28] sm:$0xf]
      %v291 = vld [vmem:[%s219 + $0x2c] sm:$0xf]
      %v292 = vld [vmem:[%s219 + $0x30] sm:$0xf]
      %v293 = vld [vmem:[%s219 + $0x34] sm:$0xf]
      %v294 = vld [vmem:[%s219 + $0x38] sm:$0xf]
      %v295 = vld [vmem:[%s219 + $0x3c] sm:$0xf]
      %v296 = vld [vmem:[%s219 + $0x40] sm:$0xf]
      %v297 = vld [vmem:[%s219 + $0x44] sm:$0xf]
      %v298 = vld [vmem:[%s219 + $0x48] sm:$0xf]
      %v299 = vld [vmem:[%s219 + $0x4c] sm:$0xf]
      %v300 = vld [vmem:[%s219 + $0x50] sm:$0xf]
      %v301 = vld [vmem:[%s219 + $0x54] sm:$0xf]
      %v302 = vld [vmem:[%s219 + $0x58] sm:$0xf]
      %v303 = vld [vmem:[%s219 + $0x5c] sm:$0xf]
      %v304 = vld [vmem:[%s219 + $0x60] sm:$0xf]
      %v305 = vld [vmem:[%s219 + $0x64] sm:$0xf]
      %v306 = vld [vmem:[%s219 + $0x68] sm:$0xf]
      %v307 = vld [vmem:[%s219 + $0x6c] sm:$0xf]
      %v308 = vld [vmem:[%s219 + $0x70] sm:$0xf]
      %v309 = vld [vmem:[%s219 + $0x74] sm:$0xf]
      %v310 = vld [vmem:[%s219 + $0x78] sm:$0xf]
      %v311 = vld [vmem:[%s219 + $0x7c] sm:$0xf]
      %v328 = vunpack.c.l.b16 %v264
      %v329 = vunpack.c.h.b16 %v264
      %v330 = vunpack.c.l.b16 %v265
      %v331 = vunpack.c.h.b16 %v265
      %v332 = vunpack.c.l.b16 %v266
      %v333 = vunpack.c.h.b16 %v266
      %v334 = vunpack.c.l.b16 %v267
      %v335 = vunpack.c.h.b16 %v267
      %v336 = vunpack.c.l.b16 %v268
      %v337 = vunpack.c.h.b16 %v268
      %v338 = vunpack.c.l.b16 %v269
      %v339 = vunpack.c.h.b16 %v269
      %v340 = vunpack.c.l.b16 %v270
      %v341 = vunpack.c.h.b16 %v270
      %v342 = vunpack.c.l.b16 %v271
      %v343 = vunpack.c.h.b16 %v271
      %v344 = vunpack.c.l.b16 %v272
      %v345 = vunpack.c.h.b16 %v272
      %v346 = vunpack.c.l.b16 %v273
      %v347 = vunpack.c.h.b16 %v273
      %v348 = vunpack.c.l.b16 %v274
      %v349 = vunpack.c.h.b16 %v274
      %v350 = vunpack.c.l.b16 %v275
      %v351 = vunpack.c.h.b16 %v275
      %v352 = vunpack.c.l.b16 %v276
      %v353 = vunpack.c.h.b16 %v276
      %v354 = vunpack.c.l.b16 %v277
      %v355 = vunpack.c.h.b16 %v277
      %v356 = vunpack.c.l.b16 %v278
      %v357 = vunpack.c.h.b16 %v278
      %v358 = vunpack.c.l.b16 %v279
      %v359 = vunpack.c.h.b16 %v279
      %v360 = vpack.c.b16 %v330, %v328
      %v361 = vpack.c.b16 %v331, %v329
      %v362 = vpack.c.b16 %v334, %v332
      %v363 = vpack.c.b16 %v335, %v333
      %v364 = vpack.c.b16 %v338, %v336
      %v365 = vpack.c.b16 %v339, %v337
      %v366 = vpack.c.b16 %v342, %v340
      %v367 = vpack.c.b16 %v343, %v341
      %v368 = vpack.c.b16 %v346, %v344
      %v369 = vpack.c.b16 %v347, %v345
      %v370 = vpack.c.b16 %v350, %v348
      %v371 = vpack.c.b16 %v351, %v349
      %v372 = vpack.c.b16 %v354, %v352
      %v373 = vpack.c.b16 %v355, %v353
      %v374 = vpack.c.b16 %v358, %v356
      %v375 = vpack.c.b16 %v359, %v357
      %v424 = vunpack.c.l.b16 %v280
      %v425 = vunpack.c.l.b16 %v281
      %v426 = vunpack.c.l.b16 %v282
      %v427 = vunpack.c.l.b16 %v283
      %v428 = vunpack.c.l.b16 %v284
      %v429 = vunpack.c.l.b16 %v285
      %v430 = vunpack.c.l.b16 %v286
      %v431 = vunpack.c.l.b16 %v287
      %v432 = vunpack.c.l.b16 %v288
      %v433 = vunpack.c.l.b16 %v289
      %v434 = vunpack.c.l.b16 %v290
      %v435 = vunpack.c.l.b16 %v291
      %v436 = vunpack.c.l.b16 %v292
      %v437 = vunpack.c.l.b16 %v293
      %v438 = vunpack.c.l.b16 %v294
      %v439 = vunpack.c.l.b16 %v295
      %v440 = vunpack.c.l.b16 %v296
      %v441 = vunpack.c.l.b16 %v297
      %v442 = vunpack.c.l.b16 %v298
      %v443 = vunpack.c.l.b16 %v299
      %v444 = vunpack.c.l.b16 %v300
      %v445 = vunpack.c.l.b16 %v301
      %v446 = vunpack.c.l.b16 %v302
      %v447 = vunpack.c.l.b16 %v303
      %v448 = vunpack.c.l.b16 %v304
      %v449 = vunpack.c.l.b16 %v305
      %v450 = vunpack.c.l.b16 %v306
      %v451 = vunpack.c.l.b16 %v307
      %v452 = vunpack.c.l.b16 %v308
      %v453 = vunpack.c.l.b16 %v309
      %v454 = vunpack.c.l.b16 %v310
      %v455 = vunpack.c.l.b16 %v311
      %v456 = vpack.c.b16 %v425, %v424
      %v457 = vpack.c.b16 %v427, %v426
      %v458 = vpack.c.b16 %v429, %v428
      %v459 = vpack.c.b16 %v431, %v430
      %v460 = vpack.c.b16 %v433, %v432
      %v461 = vpack.c.b16 %v435, %v434
      %v462 = vpack.c.b16 %v437, %v436
      %v463 = vpack.c.b16 %v439, %v438
      %v464 = vpack.c.b16 %v441, %v440
      %v465 = vpack.c.b16 %v443, %v442
      %v466 = vpack.c.b16 %v445, %v444
      %v467 = vpack.c.b16 %v447, %v446
      %v468 = vpack.c.b16 %v449, %v448
      %v469 = vpack.c.b16 %v451, %v450
      %v470 = vpack.c.b16 %v453, %v452
      %v471 = vpack.c.b16 %v455, %v454
      %488 = vmatprep.subr.bf16.mxu0 0
      %489 = vmatpush1.bf16.msra.mxu0 %v456
      %490 = vmatprep.subr.bf16.mxu0 0
      %491 = vmatpush1.bf16.msra.mxu0 %v457
      %492 = vmatprep.subr.bf16.mxu0 0
      %493 = vmatpush1.bf16.msra.mxu0 %v458
      %494 = vmatprep.subr.bf16.mxu0 0
      %495 = vmatpush1.bf16.msra.mxu0 %v459
      %496 = vmatprep.subr.bf16.mxu0 0
      %497 = vmatpush1.bf16.msra.mxu0 %v460
      %498 = vmatprep.subr.bf16.mxu0 0
      %499 = vmatpush1.bf16.msra.mxu0 %v461
      %500 = vmatprep.subr.bf16.mxu0 0
      %501 = vmatpush1.bf16.msra.mxu0 %v462
      %502 = vmatprep.subr.bf16.mxu0 0
      %503 = vmatpush1.bf16.msra.mxu0 %v463
      %504 = vmatprep.subr.bf16.mxu0 0
      %505 = vmatpush1.bf16.msra.mxu0 %v464
      %506 = vmatprep.subr.bf16.mxu0 0
      %507 = vmatpush1.bf16.msra.mxu0 %v465
      %508 = vmatprep.subr.bf16.mxu0 0
      %509 = vmatpush1.bf16.msra.mxu0 %v466
      %510 = vmatprep.subr.bf16.mxu0 0
      %511 = vmatpush1.bf16.msra.mxu0 %v467
      %512 = vmatprep.subr.bf16.mxu0 0
      %513 = vmatpush1.bf16.msra.mxu0 %v468
      %514 = vmatprep.subr.bf16.mxu0 0
      %515 = vmatpush1.bf16.msra.mxu0 %v469
      %516 = vmatprep.subr.bf16.mxu0 0
      %517 = vmatpush1.bf16.msra.mxu0 %v470
      %518 = vmatprep.subr.bf16.mxu0 0
      %519 = vmatpush1.bf16.msra.mxu0 %v471
      %520 = vmatprep.mubr.bf16.mxu0 %v361
      %521 = vmatmul.mubr.bf16.gmra.mrb[0].mxu0 %v360
      %v522 = vpop.f32.mrb[0].mxu0
      %v523 = vadd.f32 0.0, %v522
      %v524 = vpop.f32.mrb[0].mxu0
      %v525 = vpop.f32.mrb[0].mxu0
      %v526 = vadd.f32 0.0, %v525
      %v527 = vpop.f32.mrb[0].mxu0
      %528 = vmatprep.mubr.bf16.mxu0 %v363
      %529 = vmatmul.mubr.bf16.gmra.mrb[0].mxu0 %v362
      %v530 = vpop.f32.mrb[0].mxu0
      %v531 = vadd.f32 0.0, %v530
      %v532 = vpop.f32.mrb[0].mxu0
      %v533 = vpop.f32.mrb[0].mxu0
      %v534 = vadd.f32 0.0, %v533
      %v535 = vpop.f32.mrb[0].mxu0
      %536 = vmatprep.mubr.bf16.mxu0 %v365
      %537 = vmatmul.mubr.bf16.gmra.mrb[0].mxu0 %v364
      %v538 = vpop.f32.mrb[0].mxu0
      %v539 = vadd.f32 0.0, %v538
      %v540 = vpop.f32.mrb[0].mxu0
      %v541 = vpop.f32.mrb[0].mxu0
      %v542 = vadd.f32 0.0, %v541
      %v543 = vpop.f32.mrb[0].mxu0
      %544 = vmatprep.mubr.bf16.mxu0 %v367
      %545 = vmatmul.mubr.bf16.gmra.mrb[0].mxu0 %v366
      %v546 = vpop.f32.mrb[0].mxu0
      %v547 = vadd.f32 0.0, %v546
      %v548 = vpop.f32.mrb[0].mxu0
      %v549 = vpop.f32.mrb[0].mxu0
      %v550 = vadd.f32 0.0, %v549
      %v551 = vpop.f32.mrb[0].mxu0
      %552 = vmatprep.mubr.bf16.mxu0 %v369
      %553 = vmatmul.mubr.bf16.gmra.mrb[0].mxu0 %v368
      %v554 = vpop.f32.mrb[0].mxu0
      %v555 = vadd.f32 0.0, %v554
      %v556 = vpop.f32.mrb[0].mxu0
      %v557 = vpop.f32.mrb[0].mxu0
      %v558 = vadd.f32 0.0, %v557
      %v559 = vpop.f32.mrb[0].mxu0
      %560 = vmatprep.mubr.bf16.mxu0 %v371
      %561 = vmatmul.mubr.bf16.gmra.mrb[0].mxu0 %v370
      %v562 = vpop.f32.mrb[0].mxu0
      %v563 = vadd.f32 0.0, %v562
      %v564 = vpop.f32.mrb[0].mxu0
      %v565 = vpop.f32.mrb[0].mxu0
      %v566 = vadd.f32 0.0, %v565
      %v567 = vpop.f32.mrb[0].mxu0
      %568 = vmatprep.mubr.bf16.mxu0 %v373
      %569 = vmatmul.mubr.bf16.gmra.mrb[0].mxu0 %v372
      %v570 = vpop.f32.mrb[0].mxu0
      %v571 = vadd.f32 0.0, %v570
      %v572 = vpop.f32.mrb[0].mxu0
      %v573 = vpop.f32.mrb[0].mxu0
      %v574 = vadd.f32 0.0, %v573
      %v575 = vpop.f32.mrb[0].mxu0
      %576 = vmatprep.mubr.bf16.mxu0 %v375
      %577 = vmatmul.mubr.bf16.gmra.mrb[0].mxu0 %v374
      %v578 = vpop.f32.mrb[0].mxu0
      %v579 = vadd.f32 0.0, %v578
      %v580 = vpop.f32.mrb[0].mxu0
      %v581 = vpop.f32.mrb[0].mxu0
      %v582 = vadd.f32 0.0, %v581
      %v583 = vpop.f32.mrb[0].mxu0
      %584 = vdwg.mxu0
      %v585 = vadd.f32 %v248, %v523
      %v586 = vadd.f32 %v249, %v526
      %v587 = vadd.f32 %v250, %v531
      %v588 = vadd.f32 %v251, %v534
      %v589 = vadd.f32 %v252, %v539
      %v590 = vadd.f32 %v253, %v542
      %v591 = vadd.f32 %v254, %v547
      %v592 = vadd.f32 %v255, %v550
      %v593 = vadd.f32 %v256, %v555
      %v594 = vadd.f32 %v257, %v558
      %v595 = vadd.f32 %v258, %v563
      %v596 = vadd.f32 %v259, %v566
      %v597 = vadd.f32 %v260, %v571
      %v598 = vadd.f32 %v261, %v574
      %v599 = vadd.f32 %v262, %v579
      %v600 = vadd.f32 %v263, %v582
      %601 = vst [vmem:[#allocation2] sm:$0xff] %v585
      %602 = vst [vmem:[#allocation2 + $0x8] sm:$0xff] %v586
      %603 = vst [vmem:[#allocation2 + $0x10] sm:$0xff] %v587
      %604 = vst [vmem:[#allocation2 + $0x18] sm:$0xff] %v588
      %605 = vst [vmem:[#allocation2 + $0x20] sm:$0xff] %v589
      %606 = vst [vmem:[#allocation2 + $0x28] sm:$0xff] %v590
      %607 = vst [vmem:[#allocation2 + $0x30] sm:$0xff] %v591
      %608 = vst [vmem:[#allocation2 + $0x38] sm:$0xff] %v592
      %609 = vst [vmem:[#allocation2 + $0x40] sm:$0xff] %v593
      %610 = vst [vmem:[#allocation2 + $0x48] sm:$0xff] %v594
      %611 = vst [vmem:[#allocation2 + $0x50] sm:$0xff] %v595
      %612 = vst [vmem:[#allocation2 + $0x58] sm:$0xff] %v596
      %613 = vst [vmem:[#allocation2 + $0x60] sm:$0xff] %v597
      %614 = vst [vmem:[#allocation2 + $0x68] sm:$0xff] %v598
      %615 = vst [vmem:[#allocation2 + $0x70] sm:$0xff] %v599
      %616 = vst [vmem:[#allocation2 + $0x78] sm:$0xff] %v600
      // Predicated region
      $region37: #{gcn2_forward.3} parent=31 // pred_check
        %p617 = pneg %p228
      $region38: #{gcn2_forward.3} parent=31 // pred_check_branch
        %619 = sbr.rel (%p617) target = $region40
      $region39: #{gcn2_forward.3} parent=31 // pred_region
        %v620 = vld [vmem:[#allocation2] sm:$0xff]
        %v621 = vld [vmem:[#allocation2 + $0x8] sm:$0xff]
        %v622 = vld [vmem:[#allocation2 + $0x10] sm:$0xff]
        %v623 = vld [vmem:[#allocation2 + $0x18] sm:$0xff]
        %v624 = vld [vmem:[#allocation2 + $0x20] sm:$0xff]
        %v625 = vld [vmem:[#allocation2 + $0x28] sm:$0xff]
        %v626 = vld [vmem:[#allocation2 + $0x30] sm:$0xff]
        %v627 = vld [vmem:[#allocation2 + $0x38] sm:$0xff]
        %v628 = vld [vmem:[#allocation2 + $0x40] sm:$0xff]
        %v629 = vld [vmem:[#allocation2 + $0x48] sm:$0xff]
        %v630 = vld [vmem:[#allocation2 + $0x50] sm:$0xff]
        %v631 = vld [vmem:[#allocation2 + $0x58] sm:$0xff]
        %v632 = vld [vmem:[#allocation2 + $0x60] sm:$0xff]
        %v633 = vld [vmem:[#allocation2 + $0x68] sm:$0xff]
        %v634 = vld [vmem:[#allocation2 + $0x70] sm:$0xff]
        %v635 = vld [vmem:[#allocation2 + $0x78] sm:$0xff]
        %v636 = vld [vmem:[%s2] sm:$0x1]
        %v638 = vlaneseq
        %v639 = vshrl.u32 %v638, 7
        %v640 = vsub.s32 0, %v639
        %v641 = vrot.slane %v636, %v640
        %v643 = vadd.f32 %v620, %v641
        %v644 = vadd.f32 %v621, %v641
        %v645 = vadd.f32 %v622, %v641
        %v646 = vadd.f32 %v623, %v641
        %v647 = vadd.f32 %v624, %v641
        %v648 = vadd.f32 %v625, %v641
        %v649 = vadd.f32 %v626, %v641
        %v650 = vadd.f32 %v627, %v641
        %v651 = vadd.f32 %v628, %v641
        %v652 = vadd.f32 %v629, %v641
        %v653 = vadd.f32 %v630, %v641
        %v654 = vadd.f32 %v631, %v641
        %v655 = vadd.f32 %v632, %v641
        %v656 = vadd.f32 %v633, %v641
        %v657 = vadd.f32 %v634, %v641
        %v658 = vadd.f32 %v635, %v641
        %659 = vst [vmem:[%s225] sm:$0xff] %v643
        %660 = vst [vmem:[%s225 + $0x8] sm:$0xff] %v644
        %661 = vst [vmem:[%s225 + $0x10] sm:$0xff] %v645
        %662 = vst [vmem:[%s225 + $0x18] sm:$0xff] %v646
        %663 = vst [vmem:[%s225 + $0x20] sm:$0xff] %v647
        %664 = vst [vmem:[%s225 + $0x28] sm:$0xff] %v648
        %665 = vst [vmem:[%s225 + $0x30] sm:$0xff] %v649
        %666 = vst [vmem:[%s225 + $0x38] sm:$0xff] %v650
        %667 = vst [vmem:[%s225 + $0x40] sm:$0xff] %v651
        %668 = vst [vmem:[%s225 + $0x48] sm:$0xff] %v652
        %669 = vst [vmem:[%s225 + $0x50] sm:$0xff] %v653
        %670 = vst [vmem:[%s225 + $0x58] sm:$0xff] %v654
        %671 = vst [vmem:[%s225 + $0x60] sm:$0xff] %v655
        %672 = vst [vmem:[%s225 + $0x68] sm:$0xff] %v656
        %673 = vst [vmem:[%s225 + $0x70] sm:$0xff] %v657
        %674 = vst [vmem:[%s225 + $0x78] sm:$0xff] %v658
      $region40: #{gcn2_forward.3} parent=31 // pred_fallthru
        _
      %s675 = smul.u32 16, %s18
      %p676 = scmp.lt.s32.totalorder %s675, 31
      %s677 = scalar_select %p676, %s675, 31
      %s678 = smul.addr %s677, 8
      %s679 = scalar_lea.vmem %s3, %s678
      // Predicated region
      $region41: #{gcn2_forward.3} parent=31 // pred_check
        %p680 = pneg %p119
      $region42: #{gcn2_forward.3} parent=31 // pred_check_branch
        %682 = sbr.rel (%p680) target = $region44
      $region43: #{gcn2_forward.3} parent=31 // pred_region
        %s683 = smul.u32 16, %s18
      $region44: #{gcn2_forward.3} parent=31 // pred_fallthru
        _
    $region32: #{gcn2_forward.3} parent=5 // pred_fallthru
      _
    %p684 = scmp.le.s32.totalorder 2, %s9
    // Predicated region
    $region45: #{gcn2_forward.3} parent=5 // pred_check
      %p685 = pneg %p684
    $region46: #{gcn2_forward.3} parent=5 // pred_check_branch
      %687 = sbr.rel (%p685) target = $region48
    $region47: #{gcn2_forward.3} parent=5 // pred_region
      %s688 = ssub.s32 %s9, 2
      // Predicated region
      $region49: #{gcn2_forward.3} parent=47 // pred_check
        %p689 = pneg %p125
      $region50: #{gcn2_forward.3} parent=47 // pred_check_branch
        %691 = sbr.rel (%p689) target = $region52
      $region51: #{gcn2_forward.3} parent=47 // pred_region
        %s692 = smul.u32 16, %s20
        %p693 = scmp.lt.s32.totalorder %s692, 31
        %s694 = scalar_select %p693, %s692, 31
        %s695 = smul.addr %s694, 8
        %s696 = scalar_lea.vmem %s3, %s695
      $region52: #{gcn2_forward.3} parent=47 // pred_fallthru
        _
    $region48: #{gcn2_forward.3} parent=5 // pred_fallthru
      _
  $region6: #{gcn2_forward.3} parent=0 // loop_footer
    %s13 = sadd.s32 1, %s9
  $region7: #{gcn2_forward.3} parent=0 // loop_footer_branch
    %8 = sbr.rel target = $region3
  $region8: #{gcn2_forward.3} parent=0 // loop_exit
    _

// kernel: gcn2_forward.2
$region0: #{gcn2_forward.2}
  #allocation0 [shape = 'u32[]', space=smem, size = 0x4, offset = 0x4, fixed_abs, tag = 'smem constant byte address 0x4 - core index']
  #allocation1 [shape = 'u32[144,128]{1,0:T(1,128)}', space=vmem, size = 0x12000, scoped, tag = 'internal scratch']
  #allocation2 [shape = 'f32[128,128]{1,0:T(8,128)}', space=vmem, size = 0x10000, scoped, tag = 'scratch operand']
  %s0 = inlined_call_operand.vmem [shape: bf16[256,256], index: 0, kind: input, shape index: {}]
  %s1 = inlined_call_operand.vmem [shape: bf16[256,128], index: 1, kind: input, shape index: {}]
  %s2 = inlined_call_operand.vmem [shape: f32[1,128], index: 2, kind: input, shape index: {}]
  %s3 = inlined_call_operand.vmem [shape: bf16[128,128], index: 3, kind: input, shape index: {}]
  %s4 = inlined_call_operand.vmem [shape: bf16[256,128], index: 4, kind: output, shape index: {}]
  %s5 = sld [smem:[#allocation0]]
  $region57: #{gcn2_forward.2} parent=0
    _
  %s7 = ssub.s32 1, %s5
  %s8 = scalar_select 0, %s7, %s5
  loop: start=0, step=1, limit=4
  $region2: #{gcn2_forward.2} parent=0 // loop_pre_header
    _
  $region3: #{gcn2_forward.2} parent=0 // loop_header
    %s10 = sphi 0, %s14
    %p11 = scmp.ge.s32.totalorder %s10, 4
    %s17 = sphi 0, %s29
    %s18 = sphi 0, %s25
    %s19 = sphi 0, %s17
    %s20 = sphi 0, %s18
    %s21 = sphi 0, %s19
    %s22 = sphi 0, %s20
    %s34 = sphi 0, %s36
    %s37 = sphi 0, %s34
    %s38 = sphi 0, %s37
    %s54 = sphi 0, %s38
    %s60 = sphi 0, %s62
    %s63 = sphi 0, %s60
    %s64 = sphi 0, %s63
    %s80 = sphi 0, %s64
    %s84 = sphi 0, %s84
    %s86 = sphi 0, %s84
    %s87 = sphi 0, %s86
    %s101 = sphi 0, %s87
    %s105 = sphi 0, %s105
    %s107 = sphi 0, %s105
    %s108 = sphi 0, %s107
    %s122 = sphi 0, %s108
    %s128 = sphi 0, %s130
    %s131 = sphi 0, %s128
    %s132 = sphi 0, %s131
    %s148 = sphi 0, %s132
  $region4: #{gcn2_forward.2} parent=0 // loop_header_branch
    %13 = sbr.rel (%p11) target = $region8
  $region5: #{gcn2_forward.2} parent=0 // loop_body
    %s15 = ssub.s32 %s10, 1
    %s16 = ssub.s32 %s10, 2
    %s23 = sadd.s32 1, %s18
    %p24 = scmp.ge.s32.totalorder %s23, 1
    %s25 = scalar_select %p24, 0, %s23
    %s26 = sadd.s32 1, %s17
    %s27 = scalar_select %p24, %s26, %s17
    %p28 = scmp.ge.s32.totalorder %s27, 2
    %s29 = scalar_select %p28, 0, %s27
    %s30 = ssub.s32 %s17, %s29
    %s31 = ssub.s32 %s18, %s25
    %s32 = sor.u32 %s30, %s31
    %p33 = scmp.eq.s32.totalorder %s32, 0
    %s35 = sadd.s32 %s34, 1
    %s36 = scalar_select %p33, %s34, %s35
    %p39 = pneg %p33
    %p40 = scmp.eq.s32.totalorder %s10, 1
    %p41 = por %p39, %p40
    %p42 = scmp.ne.s32.totalorder %s34, %s37
    %p43 = scmp.eq.s32.totalorder %s10, 0
    %p44 = por %p42, %p43
    %p45 = scmp.ne.s32.totalorder %s34, %s37
    %p46 = scmp.eq.s32.totalorder %s15, 1
    %p47 = por %p45, %p46
    %p48 = scmp.ne.s32.totalorder %s37, %s38
    %p49 = scmp.eq.s32.totalorder %s15, 0
    %p50 = por %p48, %p49
    %p51 = scmp.ne.s32.totalorder %s37, %s38
    %p52 = scmp.eq.s32.totalorder %s16, 1
    %p53 = por %p51, %p52
    %p55 = scmp.ne.s32.totalorder %s38, %s54
    %p56 = scmp.eq.s32.totalorder %s16, 0
    %p57 = por %p55, %p56
    %s58 = ssub.s32 %s18, %s25
    %p59 = scmp.eq.s32.totalorder %s58, 0
    %s61 = sadd.s32 %s60, 1
    %s62 = scalar_select %p59, %s60, %s61
    %p65 = pneg %p59
    %p66 = scmp.eq.s32.totalorder %s10, 1
    %p67 = por %p65, %p66
    %p68 = scmp.ne.s32.totalorder %s60, %s63
    %p69 = scmp.eq.s32.totalorder %s10, 0
    %p70 = por %p68, %p69
    %p71 = scmp.ne.s32.totalorder %s60, %s63
    %p72 = scmp.eq.s32.totalorder %s15, 1
    %p73 = por %p71, %p72
    %p74 = scmp.ne.s32.totalorder %s63, %s64
    %p75 = scmp.eq.s32.totalorder %s15, 0
    %p76 = por %p74, %p75
    %p77 = scmp.ne.s32.totalorder %s63, %s64
    %p78 = scmp.eq.s32.totalorder %s16, 1
    %p79 = por %p77, %p78
    %p81 = scmp.ne.s32.totalorder %s64, %s80
    %p82 = scmp.eq.s32.totalorder %s16, 0
    %p83 = por %p81, %p82
    %s85 = sadd.s32 %s84, 1
    %p88 = scmp.eq.s32.totalorder %s10, 1
    %p89 = scmp.ne.s32.totalorder %s84, %s86
    %p90 = scmp.eq.s32.totalorder %s10, 0
    %p91 = por %p89, %p90
    %p92 = scmp.ne.s32.totalorder %s84, %s86
    %p93 = scmp.eq.s32.totalorder %s15, 1
    %p94 = por %p92, %p93
    %p95 = scmp.ne.s32.totalorder %s86, %s87
    %p96 = scmp.eq.s32.totalorder %s15, 0
    %p97 = por %p95, %p96
    %p98 = scmp.ne.s32.totalorder %s86, %s87
    %p99 = scmp.eq.s32.totalorder %s16, 1
    %p100 = por %p98, %p99
    %p102 = scmp.ne.s32.totalorder %s87, %s101
    %p103 = scmp.eq.s32.totalorder %s16, 0
    %p104 = por %p102, %p103
    %s106 = sadd.s32 %s105, 1
    %p109 = scmp.eq.s32.totalorder %s10, 1
    %p110 = scmp.ne.s32.totalorder %s105, %s107
    %p111 = scmp.eq.s32.totalorder %s10, 0
    %p112 = por %p110, %p111
    %p113 = scmp.ne.s32.totalorder %s105, %s107
    %p114 = scmp.eq.s32.totalorder %s15, 1
    %p115 = por %p113, %p114
    %p116 = scmp.ne.s32.totalorder %s107, %s108
    %p117 = scmp.eq.s32.totalorder %s15, 0
    %p118 = por %p116, %p117
    %p119 = scmp.ne.s32.totalorder %s107, %s108
    %p120 = scmp.eq.s32.totalorder %s16, 1
    %p121 = por %p119, %p120
    %p123 = scmp.ne.s32.totalorder %s108, %s122
    %p124 = scmp.eq.s32.totalorder %s16, 0
    %p125 = por %p123, %p124
    %s126 = ssub.s32 %s17, %s29
    %p127 = scmp.eq.s32.totalorder %s126, 0
    %s129 = sadd.s32 %s128, 1
    %s130 = scalar_select %p127, %s128, %s129
    %p133 = pneg %p127
    %p134 = scmp.eq.s32.totalorder %s10, 1
    %p135 = por %p133, %p134
    %p136 = scmp.ne.s32.totalorder %s128, %s131
    %p137 = scmp.eq.s32.totalorder %s10, 0
    %p138 = por %p136, %p137
    %p139 = scmp.ne.s32.totalorder %s128, %s131
    %p140 = scmp.eq.s32.totalorder %s15, 1
    %p141 = por %p139, %p140
    %p142 = scmp.ne.s32.totalorder %s131, %s132
    %p143 = scmp.eq.s32.totalorder %s15, 0
    %p144 = por %p142, %p143
    %p145 = scmp.ne.s32.totalorder %s131, %s132
    %p146 = scmp.eq.s32.totalorder %s16, 1
    %p147 = por %p145, %p146
    %p149 = scmp.ne.s32.totalorder %s132, %s148
    %p150 = scmp.eq.s32.totalorder %s16, 0
    %p151 = por %p149, %p150
    %p152 = scmp.le.s32.totalorder 1, %s10
    %p153 = scmp.lt.s32.totalorder %s10, 3
    %p154 = pnand %p152, %p153
    %p155 = pneg %p154
    // Predicated region
    $region9: #{gcn2_forward.2} parent=5 // pred_check
      _
    $region10: #{gcn2_forward.2} parent=5 // pred_check_branch
      %157 = sbr.rel (%p154) target = $region12
    $region11: #{gcn2_forward.2} parent=5 // pred_region
      %s158 = ssub.s32 %s10, 1
      // Predicated region
      $region13: #{gcn2_forward.2} parent=11 // pred_check
        %p159 = pneg %p76
      $region14: #{gcn2_forward.2} parent=11 // pred_check_branch
        %161 = sbr.rel (%p159) target = $region16
      $region15: #{gcn2_forward.2} parent=11 // pred_region
        %s162 = smul.u32 32, %s20
        %p163 = scmp.lt.s32.totalorder %s162, 31
        %s164 = scalar_select %p163, %s162, 31
        %s165 = smul.addr %s164, 4
        %s166 = scalar_lea.vmem %s1, %s165
        %s167 = smul.u32 32, %s20
      $region16: #{gcn2_forward.2} parent=11 // pred_fallthru
        _
      // Predicated region
      $region17: #{gcn2_forward.2} parent=11 // pred_check
        %p168 = pneg %p97
      $region18: #{gcn2_forward.2} parent=11 // pred_check_branch
        %170 = sbr.rel (%p168) target = $region20
      $region19: #{gcn2_forward.2} parent=11 // pred_region
        _
      $region20: #{gcn2_forward.2} parent=11 // pred_fallthru
        _
      // Predicated region
      $region21: #{gcn2_forward.2} parent=11 // pred_check
        %p171 = pneg %p118
      $region22: #{gcn2_forward.2} parent=11 // pred_check_branch
        %173 = sbr.rel (%p171) target = $region24
      $region23: #{gcn2_forward.2} parent=11 // pred_region
        _
      $region24: #{gcn2_forward.2} parent=11 // pred_fallthru
        _
    $region12: #{gcn2_forward.2} parent=5 // pred_fallthru
      _
    %p174 = scmp.lt.s32.totalorder %s10, 2
    // Predicated region
    $region25: #{gcn2_forward.2} parent=5 // pred_check
      %p175 = pneg %p174
    $region26: #{gcn2_forward.2} parent=5 // pred_check_branch
      %177 = sbr.rel (%p175) target = $region28
    $region27: #{gcn2_forward.2} parent=5 // pred_region
      // Predicated region
      $region29: #{gcn2_forward.2} parent=27 // pred_check
        %p178 = pneg %p44
      $region30: #{gcn2_forward.2} parent=27 // pred_check_branch
        %180 = sbr.rel (%p178) target = $region32
      $region31: #{gcn2_forward.2} parent=27 // pred_region
        %s181 = smul.u32 16, %s17
        %s182 = smul.u32 2, %s18
        %p183 = scmp.lt.s32.totalorder %s181, 31
        %s184 = scalar_select %p183, %s181, 31
        %p185 = scmp.lt.s32.totalorder %s182, 1
        %s186 = scalar_select %p185, %s182, 1
        %s187 = smul.addr %s184, 2
        %s188 = sadd.s32 %s186, %s187
        %s189 = smul.addr %s188, 4
        %s190 = scalar_lea.vmem %s0, %s189
        %s191 = smul.u32 16, %s17
        %s192 = smul.u32 2, %s18
      $region32: #{gcn2_forward.2} parent=27 // pred_fallthru
        _
    $region28: #{gcn2_forward.2} parent=5 // pred_fallthru
      _
    %p193 = scmp.le.s32.totalorder 1, %s10
    %p194 = scmp.lt.s32.totalorder %s10, 3
    %p195 = pnand %p193, %p194
    %p196 = pneg %p195
    // Predicated region
    $region33: #{gcn2_forward.2} parent=5 // pred_check
      _
    $region34: #{gcn2_forward.2} parent=5 // pred_check_branch
      %198 = sbr.rel (%p195) target = $region36
    $region35: #{gcn2_forward.2} parent=5 // pred_region
      %s199 = ssub.s32 %s10, 1
      %s200 = smul.u32 16, %s19
      %s201 = smul.u32 2, %s20
      %p202 = scmp.lt.s32.totalorder %s200, 31
      %s203 = scalar_select %p202, %s200, 31
      %p204 = scmp.lt.s32.totalorder %s201, 1
      %s205 = scalar_select %p204, %s201, 1
      %s206 = smul.addr %s203, 2
      %s207 = sadd.s32 %s205, %s206
      %s208 = smul.addr %s207, 4
      %s209 = scalar_lea.vmem %s0, %s208
      %p210 = pneg %p50
      %p211 = pneg %p47
      %s212 = smul.u32 32, %s20
      %p213 = scmp.lt.s32.totalorder %s212, 31
      %s214 = scalar_select %p213, %s212, 31
      %s215 = smul.addr %s214, 4
      %s216 = scalar_lea.vmem %s1, %s215
      %p217 = pneg %p76
      %p218 = pneg %p73
      %p219 = pneg %p97
      %p220 = pneg %p94
      %p221 = pneg %p118
      %p222 = pneg %p115
      %p223 = pneg %p144
      %p224 = pneg %p141
      %s225 = smul.u32 16, %s19
      %p226 = scmp.lt.s32.totalorder %s225, 31
      %s227 = scalar_select %p226, %s225, 31
      %s228 = smul.addr %s227, 4
      %s229 = scalar_lea.vmem %s4, %s228
      %s230 = smul.u32 16, %s19
      %s231 = smul.u32 2, %s20
      %p232 = scmp.lt.s32.totalorder %s230, 31
      %s233 = scalar_select %p232, %s230, 31
      %p234 = scmp.lt.s32.totalorder %s231, 1
      %s235 = scalar_select %p234, %s231, 1
      %s236 = smul.addr %s233, 2
      %s237 = sadd.s32 %s235, %s236
      %s238 = smul.addr %s237, 4
      %s239 = scalar_lea.vmem %s0, %s238
      %s240 = smul.u32 16, %s19
      %s241 = smul.u32 2, %s20
      %s242 = smul.u32 32, %s20
      %p243 = scmp.lt.s32.totalorder %s242, 31
      %s244 = scalar_select %p243, %s242, 31
      %s245 = smul.addr %s244, 4
      %s246 = scalar_lea.vmem %s1, %s245
      %s247 = smul.u32 32, %s20
      %s248 = smul.u32 16, %s19
      %p249 = scmp.lt.s32.totalorder %s248, 31
      %s250 = scalar_select %p249, %s248, 31
      %s251 = smul.addr %s250, 4
      %s252 = scalar_lea.vmem %s4, %s251
      %s253 = smul.u32 16, %s19
      %p255 = scmp.eq.s32.totalorder %s20, 0
      // Predicated region
      $region37: #{gcn2_forward.2} parent=35 // pred_check
        %p256 = pneg %p255
      $region38: #{gcn2_forward.2} parent=35 // pred_check_branch
        %258 = sbr.rel (%p256) target = $region40
      $region39: #{gcn2_forward.2} parent=35 // pred_region
        %259 = vst [vmem:[#allocation2] sm:$0xff] 0.0
        %260 = vst [vmem:[#allocation2 + $0x8] sm:$0xff] 0.0
        %261 = vst [vmem:[#allocation2 + $0x10] sm:$0xff] 0.0
        %262 = vst [vmem:[#allocation2 + $0x18] sm:$0xff] 0.0
        %263 = vst [vmem:[#allocation2 + $0x20] sm:$0xff] 0.0
        %264 = vst [vmem:[#allocation2 + $0x28] sm:$0xff] 0.0
        %265 = vst [vmem:[#allocation2 + $0x30] sm:$0xff] 0.0
        %266 = vst [vmem:[#allocation2 + $0x38] sm:$0xff] 0.0
        %267 = vst [vmem:[#allocation2 + $0x40] sm:$0xff] 0.0
        %268 = vst [vmem:[#allocation2 + $0x48] sm:$0xff] 0.0
        %269 = vst [vmem:[#allocation2 + $0x50] sm:$0xff] 0.0
        %270 = vst [vmem:[#allocation2 + $0x58] sm:$0xff] 0.0
        %271 = vst [vmem:[#allocation2 + $0x60] sm:$0xff] 0.0
        %272 = vst [vmem:[#allocation2 + $0x68] sm:$0xff] 0.0
        %273 = vst [vmem:[#allocation2 + $0x70] sm:$0xff] 0.0
        %274 = vst [vmem:[#allocation2 + $0x78] sm:$0xff] 0.0
      $region40: #{gcn2_forward.2} parent=35 // pred_fallthru
        _
      %v275 = vld [vmem:[#allocation2] sm:$0xff]
      %v276 = vld [vmem:[#allocation2 + $0x8] sm:$0xff]
      %v277 = vld [vmem:[#allocation2 + $0x10] sm:$0xff]
      %v278 = vld [vmem:[#allocation2 + $0x18] sm:$0xff]
      %v279 = vld [vmem:[#allocation2 + $0x20] sm:$0xff]
      %v280 = vld [vmem:[#allocation2 + $0x28] sm:$0xff]
      %v281 = vld [vmem:[#allocation2 + $0x30] sm:$0xff]
      %v282 = vld [vmem:[#allocation2 + $0x38] sm:$0xff]
      %v283 = vld [vmem:[#allocation2 + $0x40] sm:$0xff]
      %v284 = vld [vmem:[#allocation2 + $0x48] sm:$0xff]
      %v285 = vld [vmem:[#allocation2 + $0x50] sm:$0xff]
      %v286 = vld [vmem:[#allocation2 + $0x58] sm:$0xff]
      %v287 = vld [vmem:[#allocation2 + $0x60] sm:$0xff]
      %v288 = vld [vmem:[#allocation2 + $0x68] sm:$0xff]
      %v289 = vld [vmem:[#allocation2 + $0x70] sm:$0xff]
      %v290 = vld [vmem:[#allocation2 + $0x78] sm:$0xff]
      %v291 = vld [vmem:[%s239] sm:$0xff]
      %v292 = vld [vmem:[%s239 + $0x8] sm:$0xff]
      %v293 = vld [vmem:[%s239 + $0x10] sm:$0xff]
      %v294 = vld [vmem:[%s239 + $0x18] sm:$0xff]
      %v295 = vld [vmem:[%s239 + $0x20] sm:$0xff]
      %v296 = vld [vmem:[%s239 + $0x28] sm:$0xff]
      %v297 = vld [vmem:[%s239 + $0x30] sm:$0xff]
      %v298 = vld [vmem:[%s239 + $0x38] sm:$0xff]
      %v299 = vld [vmem:[%s239 + $0x40] sm:$0xff]
      %v300 = vld [vmem:[%s239 + $0x48] sm:$0xff]
      %v301 = vld [vmem:[%s239 + $0x50] sm:$0xff]
      %v302 = vld [vmem:[%s239 + $0x58] sm:$0xff]
      %v303 = vld [vmem:[%s239 + $0x60] sm:$0xff]
      %v304 = vld [vmem:[%s239 + $0x68] sm:$0xff]
      %v305 = vld [vmem:[%s239 + $0x70] sm:$0xff]
      %v306 = vld [vmem:[%s239 + $0x78] sm:$0xff]
      %v307 = vld [vmem:[%s246] sm:$0xf]
      %v308 = vld [vmem:[%s246 + $0x4] sm:$0xf]
      %v309 = vld [vmem:[%s246 + $0x8] sm:$0xf]
      %v310 = vld [vmem:[%s246 + $0xc] sm:$0xf]
      %v311 = vld [vmem:[%s246 + $0x10] sm:$0xf]
      %v312 = vld [vmem:[%s246 + $0x14] sm:$0xf]
      %v313 = vld [vmem:[%s246 + $0x18] sm:$0xf]
      %v314 = vld [vmem:[%s246 + $0x1c] sm:$0xf]
      %v315 = vld [vmem:[%s246 + $0x20] sm:$0xf]
      %v316 = vld [vmem:[%s246 + $0x24] sm:$0xf]
      %v317 = vld [vmem:[%s246 + $0x28] sm:$0xf]
      %v318 = vld [vmem:[%s246 + $0x2c] sm:$0xf]
      %v319 = vld [vmem:[%s246 + $0x30] sm:$0xf]
      %v320 = vld [vmem:[%s246 + $0x34] sm:$0xf]
      %v321 = vld [vmem:[%s246 + $0x38] sm:$0xf]
      %v322 = vld [vmem:[%s246 + $0x3c] sm:$0xf]
      %v323 = vld [vmem:[%s246 + $0x40] sm:$0xf]
      %v324 = vld [vmem:[%s246 + $0x44] sm:$0xf]
      %v325 = vld [vmem:[%s246 + $0x48] sm:$0xf]
      %v326 = vld [vmem:[%s246 + $0x4c] sm:$0xf]
      %v327 = vld [vmem:[%s246 + $0x50] sm:$0xf]
      %v328 = vld [vmem:[%s246 + $0x54] sm:$0xf]
      %v329 = vld [vmem:[%s246 + $0x58] sm:$0xf]
      %v330 = vld [vmem:[%s246 + $0x5c] sm:$0xf]
      %v331 = vld [vmem:[%s246 + $0x60] sm:$0xf]
      %v332 = vld [vmem:[%s246 + $0x64] sm:$0xf]
      %v333 = vld [vmem:[%s246 + $0x68] sm:$0xf]
      %v334 = vld [vmem:[%s246 + $0x6c] sm:$0xf]
      %v335 = vld [vmem:[%s246 + $0x70] sm:$0xf]
      %v336 = vld [vmem:[%s246 + $0x74] sm:$0xf]
      %v337 = vld [vmem:[%s246 + $0x78] sm:$0xf]
      %v338 = vld [vmem:[%s246 + $0x7c] sm:$0xf]
      %v355 = vunpack.c.l.b16 %v291
      %v356 = vunpack.c.h.b16 %v291
      %v357 = vunpack.c.l.b16 %v292
      %v358 = vunpack.c.h.b16 %v292
      %v359 = vunpack.c.l.b16 %v293
      %v360 = vunpack.c.h.b16 %v293
      %v361 = vunpack.c.l.b16 %v294
      %v362 = vunpack.c.h.b16 %v294
      %v363 = vunpack.c.l.b16 %v295
      %v364 = vunpack.c.h.b16 %v295
      %v365 = vunpack.c.l.b16 %v296
      %v366 = vunpack.c.h.b16 %v296
      %v367 = vunpack.c.l.b16 %v297
      %v368 = vunpack.c.h.b16 %v297
      %v369 = vunpack.c.l.b16 %v298
      %v370 = vunpack.c.h.b16 %v298
      %v371 = vunpack.c.l.b16 %v299
      %v372 = vunpack.c.h.b16 %v299
      %v373 = vunpack.c.l.b16 %v300
      %v374 = vunpack.c.h.b16 %v300
      %v375 = vunpack.c.l.b16 %v301
      %v376 = vunpack.c.h.b16 %v301
      %v377 = vunpack.c.l.b16 %v302
      %v378 = vunpack.c.h.b16 %v302
      %v379 = vunpack.c.l.b16 %v303
      %v380 = vunpack.c.h.b16 %v303
      %v381 = vunpack.c.l.b16 %v304
      %v382 = vunpack.c.h.b16 %v304
      %v383 = vunpack.c.l.b16 %v305
      %v384 = vunpack.c.h.b16 %v305
      %v385 = vunpack.c.l.b16 %v306
      %v386 = vunpack.c.h.b16 %v306
      %v387 = vpack.c.b16 %v357, %v355
      %v388 = vpack.c.b16 %v358, %v356
      %v389 = vpack.c.b16 %v361, %v359
      %v390 = vpack.c.b16 %v362, %v360
      %v391 = vpack.c.b16 %v365, %v363
      %v392 = vpack.c.b16 %v366, %v364
      %v393 = vpack.c.b16 %v369, %v367
      %v394 = vpack.c.b16 %v370, %v368
      %v395 = vpack.c.b16 %v373, %v371
      %v396 = vpack.c.b16 %v374, %v372
      %v397 = vpack.c.b16 %v377, %v375
      %v398 = vpack.c.b16 %v378, %v376
      %v399 = vpack.c.b16 %v381, %v379
      %v400 = vpack.c.b16 %v382, %v380
      %v401 = vpack.c.b16 %v385, %v383
      %v402 = vpack.c.b16 %v386, %v384
      %v451 = vunpack.c.l.b16 %v307
      %v452 = vunpack.c.l.b16 %v308
      %v453 = vunpack.c.l.b16 %v309
      %v454 = vunpack.c.l.b16 %v310
      %v455 = vunpack.c.l.b16 %v311
      %v456 = vunpack.c.l.b16 %v312
      %v457 = vunpack.c.l.b16 %v313
      %v458 = vunpack.c.l.b16 %v314
      %v459 = vunpack.c.l.b16 %v315
      %v460 = vunpack.c.l.b16 %v316
      %v461 = vunpack.c.l.b16 %v317
      %v462 = vunpack.c.l.b16 %v318
      %v463 = vunpack.c.l.b16 %v319
      %v464 = vunpack.c.l.b16 %v320
      %v465 = vunpack.c.l.b16 %v321
      %v466 = vunpack.c.l.b16 %v322
      %v467 = vunpack.c.l.b16 %v323
      %v468 = vunpack.c.l.b16 %v324
      %v469 = vunpack.c.l.b16 %v325
      %v470 = vunpack.c.l.b16 %v326
      %v471 = vunpack.c.l.b16 %v327
      %v472 = vunpack.c.l.b16 %v328
      %v473 = vunpack.c.l.b16 %v329
      %v474 = vunpack.c.l.b16 %v330
      %v475 = vunpack.c.l.b16 %v331
      %v476 = vunpack.c.l.b16 %v332
      %v477 = vunpack.c.l.b16 %v333
      %v478 = vunpack.c.l.b16 %v334
      %v479 = vunpack.c.l.b16 %v335
      %v480 = vunpack.c.l.b16 %v336
      %v481 = vunpack.c.l.b16 %v337
      %v482 = vunpack.c.l.b16 %v338
      %v483 = vpack.c.b16 %v452, %v451
      %v484 = vpack.c.b16 %v454, %v453
      %v485 = vpack.c.b16 %v456, %v455
      %v486 = vpack.c.b16 %v458, %v457
      %v487 = vpack.c.b16 %v460, %v459
      %v488 = vpack.c.b16 %v462, %v461
      %v489 = vpack.c.b16 %v464, %v463
      %v490 = vpack.c.b16 %v466, %v465
      %v491 = vpack.c.b16 %v468, %v467
      %v492 = vpack.c.b16 %v470, %v469
      %v493 = vpack.c.b16 %v472, %v471
      %v494 = vpack.c.b16 %v474, %v473
      %v495 = vpack.c.b16 %v476, %v475
      %v496 = vpack.c.b16 %v478, %v477
      %v497 = vpack.c.b16 %v480, %v479
      %v498 = vpack.c.b16 %v482, %v481
      %515 = vmatprep.subr.bf16.mxu0 0
      %516 = vmatpush1.bf16.msra.mxu0 %v483
      %517 = vmatprep.subr.bf16.mxu0 0
      %518 = vmatpush1.bf16.msra.mxu0 %v484
      %519 = vmatprep.subr.bf16.mxu0 0
      %520 = vmatpush1.bf16.msra.mxu0 %v485
      %521 = vmatprep.subr.bf16.mxu0 0
      %522 = vmatpush1.bf16.msra.mxu0 %v486
      %523 = vmatprep.subr.bf16.mxu0 0
      %524 = vmatpush1.bf16.msra.mxu0 %v487
      %525 = vmatprep.subr.bf16.mxu0 0
      %526 = vmatpush1.bf16.msra.mxu0 %v488
      %527 = vmatprep.subr.bf16.mxu0 0
      %528 = vmatpush1.bf16.msra.mxu0 %v489
      %529 = vmatprep.subr.bf16.mxu0 0
      %530 = vmatpush1.bf16.msra.mxu0 %v490
      %531 = vmatprep.subr.bf16.mxu0 0
      %532 = vmatpush1.bf16.msra.mxu0 %v491
      %533 = vmatprep.subr.bf16.mxu0 0
      %534 = vmatpush1.bf16.msra.mxu0 %v492
      %535 = vmatprep.subr.bf16.mxu0 0
      %536 = vmatpush1.bf16.msra.mxu0 %v493
      %537 = vmatprep.subr.bf16.mxu0 0
      %538 = vmatpush1.bf16.msra.mxu0 %v494
      %539 = vmatprep.subr.bf16.mxu0 0
      %540 = vmatpush1.bf16.msra.mxu0 %v495
      %541 = vmatprep.subr.bf16.mxu0 0
      %542 = vmatpush1.bf16.msra.mxu0 %v496
      %543 = vmatprep.subr.bf16.mxu0 0
      %544 = vmatpush1.bf16.msra.mxu0 %v497
      %545 = vmatprep.subr.bf16.mxu0 0
      %546 = vmatpush1.bf16.msra.mxu0 %v498
      %547 = vmatprep.mubr.bf16.mxu0 %v388
      %548 = vmatmul.mubr.bf16.gmra.mrb[0].mxu0 %v387
      %v549 = vpop.f32.mrb[0].mxu0
      %v550 = vadd.f32 0.0, %v549
      %v551 = vpop.f32.mrb[0].mxu0
      %v552 = vpop.f32.mrb[0].mxu0
      %v553 = vadd.f32 0.0, %v552
      %v554 = vpop.f32.mrb[0].mxu0
      %555 = vmatprep.mubr.bf16.mxu0 %v390
      %556 = vmatmul.mubr.bf16.gmra.mrb[0].mxu0 %v389
      %v557 = vpop.f32.mrb[0].mxu0
      %v558 = vadd.f32 0.0, %v557
      %v559 = vpop.f32.mrb[0].mxu0
      %v560 = vpop.f32.mrb[0].mxu0
      %v561 = vadd.f32 0.0, %v560
      %v562 = vpop.f32.mrb[0].mxu0
      %563 = vmatprep.mubr.bf16.mxu0 %v392
      %564 = vmatmul.mubr.bf16.gmra.mrb[0].mxu0 %v391
      %v565 = vpop.f32.mrb[0].mxu0
      %v566 = vadd.f32 0.0, %v565
      %v567 = vpop.f32.mrb[0].mxu0
      %v568 = vpop.f32.mrb[0].mxu0
      %v569 = vadd.f32 0.0, %v568
      %v570 = vpop.f32.mrb[0].mxu0
      %571 = vmatprep.mubr.bf16.mxu0 %v394
      %572 = vmatmul.mubr.bf16.gmra.mrb[0].mxu0 %v393
      %v573 = vpop.f32.mrb[0].mxu0
      %v574 = vadd.f32 0.0, %v573
      %v575 = vpop.f32.mrb[0].mxu0
      %v576 = vpop.f32.mrb[0].mxu0
      %v577 = vadd.f32 0.0, %v576
      %v578 = vpop.f32.mrb[0].mxu0
      %579 = vmatprep.mubr.bf16.mxu0 %v396
      %580 = vmatmul.mubr.bf16.gmra.mrb[0].mxu0 %v395
      %v581 = vpop.f32.mrb[0].mxu0
      %v582 = vadd.f32 0.0, %v581
      %v583 = vpop.f32.mrb[0].mxu0
      %v584 = vpop.f32.mrb[0].mxu0
      %v585 = vadd.f32 0.0, %v584
      %v586 = vpop.f32.mrb[0].mxu0
      %587 = vmatprep.mubr.bf16.mxu0 %v398
      %588 = vmatmul.mubr.bf16.gmra.mrb[0].mxu0 %v397
      %v589 = vpop.f32.mrb[0].mxu0
      %v590 = vadd.f32 0.0, %v589
      %v591 = vpop.f32.mrb[0].mxu0
      %v592 = vpop.f32.mrb[0].mxu0
      %v593 = vadd.f32 0.0, %v592
      %v594 = vpop.f32.mrb[0].mxu0
      %595 = vmatprep.mubr.bf16.mxu0 %v400
      %596 = vmatmul.mubr.bf16.gmra.mrb[0].mxu0 %v399
      %v597 = vpop.f32.mrb[0].mxu0
      %v598 = vadd.f32 0.0, %v597
      %v599 = vpop.f32.mrb[0].mxu0
      %v600 = vpop.f32.mrb[0].mxu0
      %v601 = vadd.f32 0.0, %v600
      %v602 = vpop.f32.mrb[0].mxu0
      %603 = vmatprep.mubr.bf16.mxu0 %v402
      %604 = vmatmul.mubr.bf16.gmra.mrb[0].mxu0 %v401
      %v605 = vpop.f32.mrb[0].mxu0
      %v606 = vadd.f32 0.0, %v605
      %v607 = vpop.f32.mrb[0].mxu0
      %v608 = vpop.f32.mrb[0].mxu0
      %v609 = vadd.f32 0.0, %v608
      %v610 = vpop.f32.mrb[0].mxu0
      %611 = vdwg.mxu0
      %v612 = vadd.f32 %v275, %v550
      %v613 = vadd.f32 %v276, %v553
      %v614 = vadd.f32 %v277, %v558
      %v615 = vadd.f32 %v278, %v561
      %v616 = vadd.f32 %v279, %v566
      %v617 = vadd.f32 %v280, %v569
      %v618 = vadd.f32 %v281, %v574
      %v619 = vadd.f32 %v282, %v577
      %v620 = vadd.f32 %v283, %v582
      %v621 = vadd.f32 %v284, %v585
      %v622 = vadd.f32 %v285, %v590
      %v623 = vadd.f32 %v286, %v593
      %v624 = vadd.f32 %v287, %v598
      %v625 = vadd.f32 %v288, %v601
      %v626 = vadd.f32 %v289, %v606
      %v627 = vadd.f32 %v290, %v609
      %628 = vst [vmem:[#allocation2] sm:$0xff] %v612
      %629 = vst [vmem:[#allocation2 + $0x8] sm:$0xff] %v613
      %630 = vst [vmem:[#allocation2 + $0x10] sm:$0xff] %v614
      %631 = vst [vmem:[#allocation2 + $0x18] sm:$0xff] %v615
      %632 = vst [vmem:[#allocation2 + $0x20] sm:$0xff] %v616
      %633 = vst [vmem:[#allocation2 + $0x28] sm:$0xff] %v617
      %634 = vst [vmem:[#allocation2 + $0x30] sm:$0xff] %v618
      %635 = vst [vmem:[#allocation2 + $0x38] sm:$0xff] %v619
      %636 = vst [vmem:[#allocation2 + $0x40] sm:$0xff] %v620
      %637 = vst [vmem:[#allocation2 + $0x48] sm:$0xff] %v621
      %638 = vst [vmem:[#allocation2 + $0x50] sm:$0xff] %v622
      %639 = vst [vmem:[#allocation2 + $0x58] sm:$0xff] %v623
      %640 = vst [vmem:[#allocation2 + $0x60] sm:$0xff] %v624
      %641 = vst [vmem:[#allocation2 + $0x68] sm:$0xff] %v625
      %642 = vst [vmem:[#allocation2 + $0x70] sm:$0xff] %v626
      %643 = vst [vmem:[#allocation2 + $0x78] sm:$0xff] %v627
      // Predicated region
      $region41: #{gcn2_forward.2} parent=35 // pred_check
        %p644 = pneg %p255
      $region42: #{gcn2_forward.2} parent=35 // pred_check_branch
        %646 = sbr.rel (%p644) target = $region44
      $region43: #{gcn2_forward.2} parent=35 // pred_region
        %v647 = vld [vmem:[#allocation2] sm:$0xff]
        %v648 = vld [vmem:[#allocation2 + $0x8] sm:$0xff]
        %v649 = vld [vmem:[#allocation2 + $0x10] sm:$0xff]
        %v650 = vld [vmem:[#allocation2 + $0x18] sm:$0xff]
        %v651 = vld [vmem:[#allocation2 + $0x20] sm:$0xff]
        %v652 = vld [vmem:[#allocation2 + $0x28] sm:$0xff]
        %v653 = vld [vmem:[#allocation2 + $0x30] sm:$0xff]
        %v654 = vld [vmem:[#allocation2 + $0x38] sm:$0xff]
        %v655 = vld [vmem:[#allocation2 + $0x40] sm:$0xff]
        %v656 = vld [vmem:[#allocation2 + $0x48] sm:$0xff]
        %v657 = vld [vmem:[#allocation2 + $0x50] sm:$0xff]
        %v658 = vld [vmem:[#allocation2 + $0x58] sm:$0xff]
        %v659 = vld [vmem:[#allocation2 + $0x60] sm:$0xff]
        %v660 = vld [vmem:[#allocation2 + $0x68] sm:$0xff]
        %v661 = vld [vmem:[#allocation2 + $0x70] sm:$0xff]
        %v662 = vld [vmem:[#allocation2 + $0x78] sm:$0xff]
        %v663 = vld [vmem:[%s2] sm:$0x1]
        %v665 = vlaneseq
        %v666 = vshrl.u32 %v665, 7
        %v667 = vsub.s32 0, %v666
        %v668 = vrot.slane %v663, %v667
        %v670 = vadd.f32 %v647, %v668
        %v671 = vadd.f32 %v648, %v668
        %v672 = vadd.f32 %v649, %v668
        %v673 = vadd.f32 %v650, %v668
        %v674 = vadd.f32 %v651, %v668
        %v675 = vadd.f32 %v652, %v668
        %v676 = vadd.f32 %v653, %v668
        %v677 = vadd.f32 %v654, %v668
        %v678 = vadd.f32 %v655, %v668
        %v679 = vadd.f32 %v656, %v668
        %v680 = vadd.f32 %v657, %v668
        %v681 = vadd.f32 %v658, %v668
        %v682 = vadd.f32 %v659, %v668
        %v683 = vadd.f32 %v660, %v668
        %v684 = vadd.f32 %v661, %v668
        %v685 = vadd.f32 %v662, %v668
        %v686 = vmax.f32 %v670, 0.0
        %v687 = vmax.f32 %v671, 0.0
        %v688 = vmax.f32 %v672, 0.0
        %v689 = vmax.f32 %v673, 0.0
        %v690 = vmax.f32 %v674, 0.0
        %v691 = vmax.f32 %v675, 0.0
        %v692 = vmax.f32 %v676, 0.0
        %v693 = vmax.f32 %v677, 0.0
        %v694 = vmax.f32 %v678, 0.0
        %v695 = vmax.f32 %v679, 0.0
        %v696 = vmax.f32 %v680, 0.0
        %v697 = vmax.f32 %v681, 0.0
        %v698 = vmax.f32 %v682, 0.0
        %v699 = vmax.f32 %v683, 0.0
        %v700 = vmax.f32 %v684, 0.0
        %v701 = vmax.f32 %v685, 0.0
        %v702 = vpack.c.bf16 %v687, %v686
        %v703 = vpack.c.bf16 %v689, %v688
        %v704 = vpack.c.bf16 %v691, %v690
        %v705 = vpack.c.bf16 %v693, %v692
        %v706 = vpack.c.bf16 %v695, %v694
        %v707 = vpack.c.bf16 %v697, %v696
        %v708 = vpack.c.bf16 %v699, %v698
        %v709 = vpack.c.bf16 %v701, %v700
        %v710 = vld [vmem:[%s3] sm:$0xf]
        %v711 = vld [vmem:[%s3 + $0x4] sm:$0xf]
        %v712 = vld [vmem:[%s3 + $0x8] sm:$0xf]
        %v713 = vld [vmem:[%s3 + $0xc] sm:$0xf]
        %v714 = vld [vmem:[%s3 + $0x10] sm:$0xf]
        %v715 = vld [vmem:[%s3 + $0x14] sm:$0xf]
        %v716 = vld [vmem:[%s3 + $0x18] sm:$0xf]
        %v717 = vld [vmem:[%s3 + $0x1c] sm:$0xf]
        %v718 = vld [vmem:[%s3 + $0x20] sm:$0xf]
        %v719 = vld [vmem:[%s3 + $0x24] sm:$0xf]
        %v720 = vld [vmem:[%s3 + $0x28] sm:$0xf]
        %v721 = vld [vmem:[%s3 + $0x2c] sm:$0xf]
        %v722 = vld [vmem:[%s3 + $0x30] sm:$0xf]
        %v723 = vld [vmem:[%s3 + $0x34] sm:$0xf]
        %v724 = vld [vmem:[%s3 + $0x38] sm:$0xf]
        %v725 = vld [vmem:[%s3 + $0x3c] sm:$0xf]
        %v742 = vunpack.c.l.b16 %v710
        %v743 = vunpack.c.l.b16 %v711
        %v744 = vunpack.c.l.b16 %v712
        %v745 = vunpack.c.l.b16 %v713
        %v746 = vunpack.c.l.b16 %v714
        %v747 = vunpack.c.l.b16 %v715
        %v748 = vunpack.c.l.b16 %v716
        %v749 = vunpack.c.l.b16 %v717
        %v750 = vunpack.c.l.b16 %v718
        %v751 = vunpack.c.l.b16 %v719
        %v752 = vunpack.c.l.b16 %v720
        %v753 = vunpack.c.l.b16 %v721
        %v754 = vunpack.c.l.b16 %v722
        %v755 = vunpack.c.l.b16 %v723
        %v756 = vunpack.c.l.b16 %v724
        %v757 = vunpack.c.l.b16 %v725
        %v758 = vpack.c.b16 %v743, %v742
        %v759 = vpack.c.b16 %v745, %v744
        %v760 = vpack.c.b16 %v747, %v746
        %v761 = vpack.c.b16 %v749, %v748
        %v762 = vpack.c.b16 %v751, %v750
        %v763 = vpack.c.b16 %v753, %v752
        %v764 = vpack.c.b16 %v755, %v754
        %v765 = vpack.c.b16 %v757, %v756
        %774 = vmatprep.subr.bf16.mxu0 0
        %775 = vmatpush1.bf16.msra.mxu0 %v758
        %776 = vmatprep.subr.bf16.mxu0 0
        %777 = vmatpush1.bf16.msra.mxu0 %v759
        %778 = vmatprep.subr.bf16.mxu0 0
        %779 = vmatpush1.bf16.msra.mxu0 %v760
        %780 = vmatprep.subr.bf16.mxu0 0
        %781 = vmatpush1.bf16.msra.mxu0 %v761
        %782 = vmatprep.subr.bf16.mxu0 0
        %783 = vmatpush1.bf16.msra.mxu0 %v762
        %784 = vmatprep.subr.bf16.mxu0 0
        %785 = vmatpush1.bf16.msra.mxu0 %v763
        %786 = vmatprep.subr.bf16.mxu0 0
        %787 = vmatpush1.bf16.msra.mxu0 %v764
        %788 = vmatprep.subr.bf16.mxu0 0
        %789 = vmatpush1.bf16.msra.mxu0 %v765
        %790 = vmatprep.subr.bf16.mxu0 0
        %791 = vmatpush1.bf16.msra.mxu0 0
        %792 = vmatprep.subr.bf16.mxu0 0
        %793 = vmatpush1.bf16.msra.mxu0 0
        %794 = vmatprep.subr.bf16.mxu0 0
        %795 = vmatpush1.bf16.msra.mxu0 0
        %796 = vmatprep.subr.bf16.mxu0 0
        %797 = vmatpush1.bf16.msra.mxu0 0
        %798 = vmatprep.subr.bf16.mxu0 0
        %799 = vmatpush1.bf16.msra.mxu0 0
        %800 = vmatprep.subr.bf16.mxu0 0
        %801 = vmatpush1.bf16.msra.mxu0 0
        %802 = vmatprep.subr.bf16.mxu0 0
        %803 = vmatpush1.bf16.msra.mxu0 0
        %804 = vmatprep.subr.bf16.mxu0 0
        %805 = vmatpush1.bf16.msra.mxu0 0
        %806 = vmatprep.mubr.bf16.mxu0 0
        %807 = vmatmul.mubr.bf16.gmra.mrb[0].mxu0 %v702
        %v808 = vpop.f32.mrb[0].mxu0
        %v809 = vadd.f32 0.0, %v808
        %v810 = vpop.f32.mrb[0].mxu0
        %v811 = vpop.f32.mrb[0].mxu0
        %v812 = vadd.f32 0.0, %v811
        %v813 = vpop.f32.mrb[0].mxu0
        %814 = vmatprep.mubr.bf16.mxu0 0
        %815 = vmatmul.mubr.bf16.gmra.mrb[0].mxu0 %v703
        %v816 = vpop.f32.mrb[0].mxu0
        %v817 = vadd.f32 0.0, %v816
        %v818 = vpop.f32.mrb[0].mxu0
        %v819 = vpop.f32.mrb[0].mxu0
        %v820 = vadd.f32 0.0, %v819
        %v821 = vpop.f32.mrb[0].mxu0
        %822 = vmatprep.mubr.bf16.mxu0 0
        %823 = vmatmul.mubr.bf16.gmra.mrb[0].mxu0 %v704
        %v824 = vpop.f32.mrb[0].mxu0
        %v825 = vadd.f32 0.0, %v824
        %v826 = vpop.f32.mrb[0].mxu0
        %v827 = vpop.f32.mrb[0].mxu0
        %v828 = vadd.f32 0.0, %v827
        %v829 = vpop.f32.mrb[0].mxu0
        %830 = vmatprep.mubr.bf16.mxu0 0
        %831 = vmatmul.mubr.bf16.gmra.mrb[0].mxu0 %v705
        %v832 = vpop.f32.mrb[0].mxu0
        %v833 = vadd.f32 0.0, %v832
        %v834 = vpop.f32.mrb[0].mxu0
        %v835 = vpop.f32.mrb[0].mxu0
        %v836 = vadd.f32 0.0, %v835
        %v837 = vpop.f32.mrb[0].mxu0
        %838 = vmatprep.mubr.bf16.mxu0 0
        %839 = vmatmul.mubr.bf16.gmra.mrb[0].mxu0 %v706
        %v840 = vpop.f32.mrb[0].mxu0
        %v841 = vadd.f32 0.0, %v840
        %v842 = vpop.f32.mrb[0].mxu0
        %v843 = vpop.f32.mrb[0].mxu0
        %v844 = vadd.f32 0.0, %v843
        %v845 = vpop.f32.mrb[0].mxu0
        %846 = vmatprep.mubr.bf16.mxu0 0
        %847 = vmatmul.mubr.bf16.gmra.mrb[0].mxu0 %v707
        %v848 = vpop.f32.mrb[0].mxu0
        %v849 = vadd.f32 0.0, %v848
        %v850 = vpop.f32.mrb[0].mxu0
        %v851 = vpop.f32.mrb[0].mxu0
        %v852 = vadd.f32 0.0, %v851
        %v853 = vpop.f32.mrb[0].mxu0
        %854 = vmatprep.mubr.bf16.mxu0 0
        %855 = vmatmul.mubr.bf16.gmra.mrb[0].mxu0 %v708
        %v856 = vpop.f32.mrb[0].mxu0
        %v857 = vadd.f32 0.0, %v856
        %v858 = vpop.f32.mrb[0].mxu0
        %v859 = vpop.f32.mrb[0].mxu0
        %v860 = vadd.f32 0.0, %v859
        %v861 = vpop.f32.mrb[0].mxu0
        %862 = vmatprep.mubr.bf16.mxu0 0
        %863 = vmatmul.mubr.bf16.gmra.mrb[0].mxu0 %v709
        %v864 = vpop.f32.mrb[0].mxu0
        %v865 = vadd.f32 0.0, %v864
        %v866 = vpop.f32.mrb[0].mxu0
        %v867 = vpop.f32.mrb[0].mxu0
        %v868 = vadd.f32 0.0, %v867
        %v869 = vpop.f32.mrb[0].mxu0
        %870 = vdwg.mxu0
        %v871 = vpack.c.bf16 %v812, %v809
        %v872 = vpack.c.bf16 %v820, %v817
        %v873 = vpack.c.bf16 %v828, %v825
        %v874 = vpack.c.bf16 %v836, %v833
        %v875 = vpack.c.bf16 %v844, %v841
        %v876 = vpack.c.bf16 %v852, %v849
        %v877 = vpack.c.bf16 %v860, %v857
        %v878 = vpack.c.bf16 %v868, %v865
        %v887 = vunpack.c.l.b16 %v871
        %v888 = vunpack.c.h.b16 %v871
        %v889 = vunpack.c.l.b16 %v872
        %v890 = vunpack.c.h.b16 %v872
        %v891 = vunpack.c.l.b16 %v873
        %v892 = vunpack.c.h.b16 %v873
        %v893 = vunpack.c.l.b16 %v874
        %v894 = vunpack.c.h.b16 %v874
        %v895 = vunpack.c.l.b16 %v875
        %v896 = vunpack.c.h.b16 %v875
        %v897 = vunpack.c.l.b16 %v876
        %v898 = vunpack.c.h.b16 %v876
        %v899 = vunpack.c.l.b16 %v877
        %v900 = vunpack.c.h.b16 %v877
        %v901 = vunpack.c.l.b16 %v878
        %v902 = vunpack.c.h.b16 %v878
        %v903 = vpack.c.b16 %v887, %v887
        %v904 = vpack.c.b16 %v888, %v888
        %v905 = vpack.c.b16 %v889, %v889
        %v906 = vpack.c.b16 %v890, %v890
        %v907 = vpack.c.b16 %v891, %v891
        %v908 = vpack.c.b16 %v892, %v892
        %v909 = vpack.c.b16 %v893, %v893
        %v910 = vpack.c.b16 %v894, %v894
        %v911 = vpack.c.b16 %v895, %v895
        %v912 = vpack.c.b16 %v896, %v896
        %v913 = vpack.c.b16 %v897, %v897
        %v914 = vpack.c.b16 %v898, %v898
        %v915 = vpack.c.b16 %v899, %v899
        %v916 = vpack.c.b16 %v900, %v900
        %v917 = vpack.c.b16 %v901, %v901
        %v918 = vpack.c.b16 %v902, %v902
        %935 = vst [vmem:[%s252] sm:$0xf] %v903
        %936 = vst [vmem:[%s252 + $0x4] sm:$0xf] %v904
        %937 = vst [vmem:[%s252 + $0x8] sm:$0xf] %v905
        %938 = vst [vmem:[%s252 + $0xc] sm:$0xf] %v906
        %939 = vst [vmem:[%s252 + $0x10] sm:$0xf] %v907
        %940 = vst [vmem:[%s252 + $0x14] sm:$0xf] %v908
        %941 = vst [vmem:[%s252 + $0x18] sm:$0xf] %v909
        %942 = vst [vmem:[%s252 + $0x1c] sm:$0xf] %v910
        %943 = vst [vmem:[%s252 + $0x20] sm:$0xf] %v911
        %944 = vst [vmem:[%s252 + $0x24] sm:$0xf] %v912
        %945 = vst [vmem:[%s252 + $0x28] sm:$0xf] %v913
        %946 = vst [vmem:[%s252 + $0x2c] sm:$0xf] %v914
        %947 = vst [vmem:[%s252 + $0x30] sm:$0xf] %v915
        %948 = vst [vmem:[%s252 + $0x34] sm:$0xf] %v916
        %949 = vst [vmem:[%s252 + $0x38] sm:$0xf] %v917
        %950 = vst [vmem:[%s252 + $0x3c] sm:$0xf] %v918
      $region44: #{gcn2_forward.2} parent=35 // pred_fallthru
        _
      %s951 = smul.u32 16, %s19
      %p952 = scmp.lt.s32.totalorder %s951, 31
      %s953 = scalar_select %p952, %s951, 31
      %s954 = smul.addr %s953, 4
      %s955 = scalar_lea.vmem %s4, %s954
      // Predicated region
      $region45: #{gcn2_forward.2} parent=35 // pred_check
        %p956 = pneg %p141
      $region46: #{gcn2_forward.2} parent=35 // pred_check_branch
        %958 = sbr.rel (%p956) target = $region48
      $region47: #{gcn2_forward.2} parent=35 // pred_region
        %s959 = smul.u32 16, %s19
      $region48: #{gcn2_forward.2} parent=35 // pred_fallthru
        _
    $region36: #{gcn2_forward.2} parent=5 // pred_fallthru
      _
    %p960 = scmp.le.s32.totalorder 2, %s10
    // Predicated region
    $region49: #{gcn2_forward.2} parent=5 // pred_check
      %p961 = pneg %p960
    $region50: #{gcn2_forward.2} parent=5 // pred_check_branch
      %963 = sbr.rel (%p961) target = $region52
    $region51: #{gcn2_forward.2} parent=5 // pred_region
      %s964 = ssub.s32 %s10, 2
      // Predicated region
      $region53: #{gcn2_forward.2} parent=51 // pred_check
        %p965 = pneg %p147
      $region54: #{gcn2_forward.2} parent=51 // pred_check_branch
        %967 = sbr.rel (%p965) target = $region56
      $region55: #{gcn2_forward.2} parent=51 // pred_region
        %s968 = smul.u32 16, %s21
        %p969 = scmp.lt.s32.totalorder %s968, 31
        %s970 = scalar_select %p969, %s968, 31
        %s971 = smul.addr %s970, 4
        %s972 = scalar_lea.vmem %s4, %s971
      $region56: #{gcn2_forward.2} parent=51 // pred_fallthru
        _
    $region52: #{gcn2_forward.2} parent=5 // pred_fallthru
      _
  $region6: #{gcn2_forward.2} parent=0 // loop_footer
    %s14 = sadd.s32 1, %s10
  $region7: #{gcn2_forward.2} parent=0 // loop_footer_branch
    %9 = sbr.rel target = $region3
  $region8: #{gcn2_forward.2} parent=0 // loop_exit
    _

</llo_original>
